<compile_context>
chip_gen: v5e
topology: v5e:2x2
jax: 0.10.0
libtpu: 0.0.40
codegen_flags: <defaults>
</compile_context>

<pallas_src>
import functools

import jax
import jax.numpy as jnp
from jax import lax
from jax.experimental import pallas as pl
from jax.experimental.pallas import tpu as pltpu


def _conv_attention_kernel(x_ref, w3_ref, shift_ref, w1_ref, o_ref, col_ref,
                           *, bh, W, C):
    # x_ref:     (H+2, W+2, C)  bf16  zero-padded NHWC image of one batch element
    # w3_ref:    (9*C, C)       bf16  im2col-packed group-conv weight, BN scale folded
    # shift_ref: (1, C)         f32   folded BN shift  (beta - mean * scale)
    # w1_ref:    (C, C)         bf16  1x1 projection weight, (ci, co)
    # o_ref:     (bh*W, C)            output rows of this (batch, row-block) program
    # col_ref:   (bh*W, 9*C)    bf16  VMEM scratch: staged im2col matrix
    r = pl.program_id(1)
    row0 = pl.multiple_of(r * bh, bh)          # first output row of this block

    # Stage the 9 shifted 3x3-tap windows into the im2col scratch exactly once
    # (one slab load per dy, reused for the three dx shifts).
    for dy in range(3):
        slab = x_ref[pl.ds(row0 + dy, bh), :, :]              # (bh, W+2, C)
        for dx in range(3):
            k = dy * 3 + dx
            col_ref[:, k * C:(k + 1) * C] = (
                slab[:, dx:dx + W, :].reshape(bh * W, C))

    # Grouped 3x3 conv (+ folded BN scale): a single MXU matmul with K = 9*C,
    # bf16 operands, f32 accumulation (single MXU pass per K-tile).
    acc = jnp.dot(col_ref[...], w3_ref[...],
                  preferred_element_type=jnp.float32)          # (bh*W, C) f32

    # BN shift + ReLU in f32, then the 1x1 projection matmul.
    y = jnp.maximum(acc + shift_ref[...], 0.0).astype(w1_ref.dtype)
    out = jnp.dot(y, w1_ref[...], preferred_element_type=jnp.float32)

    # Flat (rows, C) store — no in-kernel (H, W, C) reshape.
    o_ref[...] = out.astype(o_ref.dtype)


def _expand_group_weight(w3, head_dim):
    """(C_out, head_dim, 3, 3) grouped weight -> block-diagonal dense (C, C, 3, 3)."""
    C = w3.shape[0]
    groups = C // head_dim
    w3_dense = jnp.zeros((C, C, 3, 3), jnp.float32)
    for g in range(groups):
        sl = slice(g * head_dim, (g + 1) * head_dim)
        w3_dense = w3_dense.at[sl, sl].set(w3[sl].astype(jnp.float32))
    return w3_dense


@functools.partial(jax.jit, static_argnames=("head_dim", "eps"))
def conv_attention(x_nchw, w3, bn_gamma, bn_beta, bn_mean, bn_var, w1,
                   head_dim, eps=1e-5):
    """ConvAttention forward. x_nchw: (N, C, H, W) float32 (PyTorch layout)."""
    N, C, H, W = x_nchw.shape

    # ---- parameter packing (traced once under jit) ---------------------------
    scale = bn_gamma / jnp.sqrt(bn_var + eps)                          # (C,)
    shift = (bn_beta - bn_mean * scale).reshape(1, C).astype(jnp.float32)

    # TODO(synk): for production NextViT channel counts (C = 384..768) keep the
    # grouped structure (per-group matmuls) instead of this dense block-diagonal
    # expansion — it wastes groups-x MXU work and weight VMEM at large C (v7x).
    w3_dense = _expand_group_weight(w3, head_dim)
    # Fold BN scale into the conv output channels (BN is linear -> exact).
    w3_dense = w3_dense * scale[:, None, None, None]
    # (C_out, C_in, ky, kx) -> (ky, kx, C_in, C_out) -> (9*C_in, C_out);
    # row index k*C + ci with k = 3*dy + dx matches the kernel's im2col columns.
    w3_pack = jnp.transpose(w3_dense, (2, 3, 1, 0)).reshape(9 * C, C)
    w3_pack = w3_pack.astype(jnp.bfloat16)

    # 1x1 conv weight (C_out, C_in, 1, 1) -> (C_in, C_out), bf16.
    w1_pack = jnp.transpose(w1[:, :, 0, 0], (1, 0)).astype(jnp.bfloat16)

    # ---- activation layout: NCHW -> padded NHWC bf16 (XLA fuses transpose +
    # cast + pad into a single HBM pass under jit). ----------------------------
    # TODO(synk): if neighbouring ops can produce/consume NHWC, drop these
    # boundary transposes and fuse the zero padding into the kernel to remove
    # the remaining wrapper HBM pass entirely.
    x_nhwc = jnp.transpose(x_nchw, (0, 2, 3, 1)).astype(jnp.bfloat16)
    x_pad = jnp.pad(x_nhwc, ((0, 0), (1, 1), (1, 1), (0, 0)))

    # ---- grid: (batch, spatial row-blocks) ------------------------------------
    r_blocks = 2 if (H % 2 == 0 and ((H // 2) * W) % 8 == 0) else 1
    bh = H // r_blocks

    kernel = functools.partial(_conv_attention_kernel, bh=bh, W=W, C=C)
    out_flat = pl.pallas_call(
        kernel,
        out_shape=jax.ShapeDtypeStruct((N, H * W, C), x_nchw.dtype),
        grid_spec=pltpu.PrefetchScalarGridSpec(
            num_scalar_prefetch=0,
            grid=(N, r_blocks),
            in_specs=[
                # Full padded image per batch element; the block index does not
                # depend on r, so the pipeline does not re-fetch it per row-block.
                pl.BlockSpec((None, H + 2, W + 2, C), lambda n, r: (n, 0, 0, 0)),
                pl.BlockSpec((9 * C, C), lambda n, r: (0, 0)),
                pl.BlockSpec((1, C), lambda n, r: (0, 0)),
                pl.BlockSpec((C, C), lambda n, r: (0, 0)),
            ],
            out_specs=pl.BlockSpec((None, bh * W, C), lambda n, r: (n, r, 0)),
            scratch_shapes=[pltpu.VMEM((bh * W, 9 * C), jnp.bfloat16)],
        ),
        compiler_params=pltpu.CompilerParams(
            dimension_semantics=("parallel", "parallel"),
            vmem_limit_bytes=32 * 1024 * 1024,
        ),
    )(x_pad, w3_pack, shift, w1_pack)

    # Free layout plumbing back to the module's NCHW contract.
    return jnp.transpose(out_flat.reshape(N, H, W, C), (0, 3, 1, 2))


def _reference_f32(x_nchw, w3, gamma, beta, mean, var, w1, head_dim, eps=1e-5):
    """Plain-JAX f32 reference matching the PyTorch forward (eval-mode BN)."""
    groups = x_nchw.shape[1] // head_dim
    out = lax.conv_general_dilated(
        x_nchw, w3, window_strides=(1, 1), padding=((1, 1), (1, 1)),
        dimension_numbers=('NCHW', 'OIHW', 'NCHW'),
        feature_group_count=groups, precision=lax.Precision.HIGHEST)
    out = ((out - mean[None, :, None, None])
           / jnp.sqrt(var[None, :, None, None] + eps)
           * gamma[None, :, None, None] + beta[None, :, None, None])
    out = jnp.maximum(out, 0.0)
    out = lax.conv_general_dilated(
        out, w1, window_strides=(1, 1), padding='VALID',
        dimension_numbers=('NCHW', 'OIHW', 'NCHW'),
        precision=lax.Precision.HIGHEST)
    return out


def _reference_bf16(x_nchw, w3, gamma, beta, mean, var, w1, head_dim, eps=1e-5):
    """Reference that mirrors the kernel's bf16-operand / f32-accumulation math."""
    scale = gamma / jnp.sqrt(var + eps)
    shift = beta - mean * scale
    w3_s = (_expand_group_weight(w3, head_dim)
            * scale[:, None, None, None]).astype(jnp.bfloat16)
    z = lax.conv_general_dilated(
        x_nchw.astype(jnp.bfloat16), w3_s, window_strides=(1, 1),
        padding=((1, 1), (1, 1)),
        dimension_numbers=('NCHW', 'OIHW', 'NCHW'),
        preferred_element_type=jnp.float32)
    y = jnp.maximum(z + shift[None, :, None, None], 0.0).astype(jnp.bfloat16)
    out = lax.conv_general_dilated(
        y, w1.astype(jnp.bfloat16), window_strides=(1, 1), padding='VALID',
        dimension_numbers=('NCHW', 'OIHW', 'NCHW'),
        preferred_element_type=jnp.float32)
    return out


if __name__ == "__main__":
    N, C, H, W = 2, 32, 16, 16
    head_dim = 8          # groups = C // head_dim = 4

    key = jax.random.PRNGKey(0)
    kx, kw3, kw1, kg, kb, km, kv = jax.random.split(key, 7)

    x = jax.random.normal(kx, (N, C, H, W), jnp.float32)
    # group_conv3x3.weight: (out_chs, head_dim, 3, 3), bias=False
    w3 = jax.random.normal(kw3, (C, head_dim, 3, 3), jnp.float32) * 0.1
    # projection.weight: (out_chs, out_chs, 1, 1), bias=False
    w1 = jax.random.normal(kw1, (C, C, 1, 1), jnp.float32) * 0.1
    # BatchNorm2d parameters / running stats (eval-mode semantics).
    bn_gamma = jax.random.uniform(kg, (C,), jnp.float32, 0.5, 1.5)
    bn_beta = jax.random.normal(kb, (C,), jnp.float32) * 0.1
    bn_mean = jax.random.normal(km, (C,), jnp.float32) * 0.1
    bn_var = jax.random.uniform(kv, (C,), jnp.float32, 0.5, 1.5)

    out = conv_attention(x, w3, bn_gamma, bn_beta, bn_mean, bn_var, w1,
                         head_dim=head_dim)
    out = jax.block_until_ready(out)
    assert out.shape == (N, C, H, W)

    # (a) Tight check against a reference with the same bf16 operand
    #     quantization and f32 accumulation (validates the kernel arithmetic).
    ref_q = _reference_bf16(x, w3, bn_gamma, bn_beta, bn_mean, bn_var, w1, head_dim)
    err_q = jnp.max(jnp.abs(out - ref_q))
    assert jnp.allclose(out, ref_q, atol=1e-3, rtol=1e-3), \
        f"bf16-quantized reference: max abs err = {err_q}"

    # (b) Sanity check against the full-f32 module semantics (looser tolerance:
    #     the kernel deliberately trades f32-HIGHEST matmuls for single-pass
    #     bf16 MXU matmuls with f32 accumulation).
    ref = _reference_f32(x, w3, bn_gamma, bn_beta, bn_mean, bn_var, w1, head_dim)
    err = jnp.max(jnp.abs(out - ref))
    assert jnp.allclose(out, ref, atol=5e-2, rtol=5e-2), \
        f"f32 reference: max abs err = {err}"

    print("KERNEL_OK")
</pallas_src>

<mosaic_0001>
module attributes {stable_mosaic.version = 11 : i64} {
  func.func @_conv_attention_kernel(%arg0: i32, %arg1: i32, %arg2: memref<1x18x18x32xbf16, #tpu.memory_space<vmem>>, %arg3: memref<288x32xbf16, #tpu.memory_space<vmem>>, %arg4: memref<1x32xf32, #tpu.memory_space<vmem>>, %arg5: memref<32x32xbf16, #tpu.memory_space<vmem>>, %arg6: memref<1x128x32xf32, #tpu.memory_space<vmem>>, %arg7: memref<128x288xbf16, #tpu.memory_space<vmem>>) attributes {dimension_semantics = [#tpu.dimension_semantics<parallel>, #tpu.dimension_semantics<parallel>], iteration_bounds = array<i64: 2, 2>, scalar_prefetch = 0 : i64, scratch_operands = 1 : i64, tpu.core_type = #tpu.core_type<tc>, window_params = [{transform_indices = @transform_0, window_bounds = array<i64: 1, 18, 18, 32>}, {pipeline_mode = #tpu.pipeline_mode<synchronous>, transform_indices = @transform_1, window_bounds = array<i64: 288, 32>}, {pipeline_mode = #tpu.pipeline_mode<synchronous>, transform_indices = @transform_2, window_bounds = array<i64: 1, 32>}, {pipeline_mode = #tpu.pipeline_mode<synchronous>, transform_indices = @transform_3, window_bounds = array<i64: 32, 32>}, {transform_indices = @transform_4, window_bounds = array<i64: 1, 128, 32>}]} {
    %c8_i32 = arith.constant 8 : i32
    %0 = arith.muli %arg1, %c8_i32 : i32
    %1 = tpu.assume_multiple %0, 8 : i32
    %c0_i32 = arith.constant 0 : i32
    %2 = arith.addi %1, %c0_i32 : i32
    %c0 = arith.constant 0 : index
    %3 = arith.index_cast %2 : i32 to index
    %c0_0 = arith.constant 0 : index
    %c0_1 = arith.constant 0 : index
    %4 = vector.load %arg2[%c0, %3, %c0_0, %c0_1] : memref<1x18x18x32xbf16, #tpu.memory_space<vmem>>, vector<1x8x18x32xbf16>
    %5 = vector.shape_cast %4 : vector<1x8x18x32xbf16> to vector<8x18x32xbf16>
    %6 = vector.extract_strided_slice %5 {offsets = [0, 0, 0], sizes = [8, 16, 32], strides = [1, 1, 1]} : vector<8x18x32xbf16> to vector<8x16x32xbf16>
    %7 = vector.shape_cast %6 : vector<8x16x32xbf16> to vector<128x32xbf16>
    %c0_2 = arith.constant 0 : index
    %c0_3 = arith.constant 0 : index
    %8 = vector.load %arg7[%c0_2, %c0_3] : memref<128x288xbf16, #tpu.memory_space<vmem>>, vector<128x32xbf16>
    tpu.vector_store %arg7[%c0_2, %c0_3], %7 {strides = array<i32>} : memref<128x288xbf16, #tpu.memory_space<vmem>>, vector<128x32xbf16>,
    %9 = vector.extract_strided_slice %5 {offsets = [0, 1, 0], sizes = [8, 16, 32], strides = [1, 1, 1]} : vector<8x18x32xbf16> to vector<8x16x32xbf16>
    %10 = vector.shape_cast %9 : vector<8x16x32xbf16> to vector<128x32xbf16>
    %c0_4 = arith.constant 0 : index
    %c32 = arith.constant 32 : index
    %11 = vector.load %arg7[%c0_4, %c32] : memref<128x288xbf16, #tpu.memory_space<vmem>>, vector<128x32xbf16>
    tpu.vector_store %arg7[%c0_4, %c32], %10 {strides = array<i32>} : memref<128x288xbf16, #tpu.memory_space<vmem>>, vector<128x32xbf16>,
    %12 = vector.extract_strided_slice %5 {offsets = [0, 2, 0], sizes = [8, 16, 32], strides = [1, 1, 1]} : vector<8x18x32xbf16> to vector<8x16x32xbf16>
    %13 = vector.shape_cast %12 : vector<8x16x32xbf16> to vector<128x32xbf16>
    %c0_5 = arith.constant 0 : index
    %c64 = arith.constant 64 : index
    %14 = vector.load %arg7[%c0_5, %c64] : memref<128x288xbf16, #tpu.memory_space<vmem>>, vector<128x32xbf16>
    tpu.vector_store %arg7[%c0_5, %c64], %13 {strides = array<i32>} : memref<128x288xbf16, #tpu.memory_space<vmem>>, vector<128x32xbf16>,
    %c1_i32 = arith.constant 1 : i32
    %15 = arith.addi %1, %c1_i32 : i32
    %c0_6 = arith.constant 0 : index
    %16 = arith.index_cast %15 : i32 to index
    %c0_7 = arith.constant 0 : index
    %c0_8 = arith.constant 0 : index
    %17 = vector.load %arg2[%c0_6, %16, %c0_7, %c0_8] : memref<1x18x18x32xbf16, #tpu.memory_space<vmem>>, vector<1x8x18x32xbf16>
    %18 = vector.shape_cast %17 : vector<1x8x18x32xbf16> to vector<8x18x32xbf16>
    %19 = vector.extract_strided_slice %18 {offsets = [0, 0, 0], sizes = [8, 16, 32], strides = [1, 1, 1]} : vector<8x18x32xbf16> to vector<8x16x32xbf16>
    %20 = vector.shape_cast %19 : vector<8x16x32xbf16> to vector<128x32xbf16>
    %c0_9 = arith.constant 0 : index
    %c96 = arith.constant 96 : index
    %21 = vector.load %arg7[%c0_9, %c96] : memref<128x288xbf16, #tpu.memory_space<vmem>>, vector<128x32xbf16>
    tpu.vector_store %arg7[%c0_9, %c96], %20 {strides = array<i32>} : memref<128x288xbf16, #tpu.memory_space<vmem>>, vector<128x32xbf16>,
    %22 = vector.extract_strided_slice %18 {offsets = [0, 1, 0], sizes = [8, 16, 32], strides = [1, 1, 1]} : vector<8x18x32xbf16> to vector<8x16x32xbf16>
    %23 = vector.shape_cast %22 : vector<8x16x32xbf16> to vector<128x32xbf16>
    %c0_10 = arith.constant 0 : index
    %c128 = arith.constant 128 : index
    %24 = vector.load %arg7[%c0_10, %c128] : memref<128x288xbf16, #tpu.memory_space<vmem>>, vector<128x32xbf16>
    tpu.vector_store %arg7[%c0_10, %c128], %23 {strides = array<i32>} : memref<128x288xbf16, #tpu.memory_space<vmem>>, vector<128x32xbf16>,
    %25 = vector.extract_strided_slice %18 {offsets = [0, 2, 0], sizes = [8, 16, 32], strides = [1, 1, 1]} : vector<8x18x32xbf16> to vector<8x16x32xbf16>
    %26 = vector.shape_cast %25 : vector<8x16x32xbf16> to vector<128x32xbf16>
    %c0_11 = arith.constant 0 : index
    %c160 = arith.constant 160 : index
    %27 = vector.load %arg7[%c0_11, %c160] : memref<128x288xbf16, #tpu.memory_space<vmem>>, vector<128x32xbf16>
    tpu.vector_store %arg7[%c0_11, %c160], %26 {strides = array<i32>} : memref<128x288xbf16, #tpu.memory_space<vmem>>, vector<128x32xbf16>,
    %c2_i32 = arith.constant 2 : i32
    %28 = arith.addi %1, %c2_i32 : i32
    %c0_12 = arith.constant 0 : index
    %29 = arith.index_cast %28 : i32 to index
    %c0_13 = arith.constant 0 : index
    %c0_14 = arith.constant 0 : index
    %30 = vector.load %arg2[%c0_12, %29, %c0_13, %c0_14] : memref<1x18x18x32xbf16, #tpu.memory_space<vmem>>, vector<1x8x18x32xbf16>
    %31 = vector.shape_cast %30 : vector<1x8x18x32xbf16> to vector<8x18x32xbf16>
    %32 = vector.extract_strided_slice %31 {offsets = [0, 0, 0], sizes = [8, 16, 32], strides = [1, 1, 1]} : vector<8x18x32xbf16> to vector<8x16x32xbf16>
    %33 = vector.shape_cast %32 : vector<8x16x32xbf16> to vector<128x32xbf16>
    %c0_15 = arith.constant 0 : index
    %c192 = arith.constant 192 : index
    %34 = vector.load %arg7[%c0_15, %c192] : memref<128x288xbf16, #tpu.memory_space<vmem>>, vector<128x32xbf16>
    tpu.vector_store %arg7[%c0_15, %c192], %33 {strides = array<i32>} : memref<128x288xbf16, #tpu.memory_space<vmem>>, vector<128x32xbf16>,
    %35 = vector.extract_strided_slice %31 {offsets = [0, 1, 0], sizes = [8, 16, 32], strides = [1, 1, 1]} : vector<8x18x32xbf16> to vector<8x16x32xbf16>
    %36 = vector.shape_cast %35 : vector<8x16x32xbf16> to vector<128x32xbf16>
    %c0_16 = arith.constant 0 : index
    %c224 = arith.constant 224 : index
    %37 = vector.load %arg7[%c0_16, %c224] : memref<128x288xbf16, #tpu.memory_space<vmem>>, vector<128x32xbf16>
    tpu.vector_store %arg7[%c0_16, %c224], %36 {strides = array<i32>} : memref<128x288xbf16, #tpu.memory_space<vmem>>, vector<128x32xbf16>,
    %38 = vector.extract_strided_slice %31 {offsets = [0, 2, 0], sizes = [8, 16, 32], strides = [1, 1, 1]} : vector<8x18x32xbf16> to vector<8x16x32xbf16>
    %39 = vector.shape_cast %38 : vector<8x16x32xbf16> to vector<128x32xbf16>
    %c0_17 = arith.constant 0 : index
    %c256 = arith.constant 256 : index
    %40 = vector.load %arg7[%c0_17, %c256] : memref<128x288xbf16, #tpu.memory_space<vmem>>, vector<128x32xbf16>
    tpu.vector_store %arg7[%c0_17, %c256], %39 {strides = array<i32>} : memref<128x288xbf16, #tpu.memory_space<vmem>>, vector<128x32xbf16>,
    %c0_18 = arith.constant 0 : index
    %c0_19 = arith.constant 0 : index
    %41 = vector.load %arg7[%c0_18, %c0_19] : memref<128x288xbf16, #tpu.memory_space<vmem>>, vector<128x288xbf16>
    %c0_20 = arith.constant 0 : index
    %c0_21 = arith.constant 0 : index
    %42 = vector.load %arg3[%c0_20, %c0_21] : memref<288x32xbf16, #tpu.memory_space<vmem>>, vector<288x32xbf16>
    %cst = arith.constant dense<0.000000e+00> : vector<128x32xf32>
    %43 = tpu.matmul %41, %42, %cst {dimension_numbers = #tpu.dot_dimension_numbers<[1], [0], [0], [1], [0, 0, 1, 1], [], []>} : vector<128x288xbf16>, vector<288x32xbf16>, vector<128x32xf32> -> vector<128x32xf32>
    %c0_22 = arith.constant 0 : index
    %c0_23 = arith.constant 0 : index
    %44 = vector.load %arg4[%c0_22, %c0_23] : memref<1x32xf32, #tpu.memory_space<vmem>>, vector<1x32xf32>
    %45 = vector.broadcast %44 : vector<1x32xf32> to vector<128x32xf32>
    %46 = arith.addf %43, %45 : vector<128x32xf32>
    %cst_24 = arith.constant 0.000000e+00 : f32
    %47 = vector.broadcast %cst_24 : f32 to vector<128x32xf32>
    %48 = arith.maximumf %46, %47 : vector<128x32xf32>
    %49 = arith.truncf %48 : vector<128x32xf32> to vector<128x32xbf16>
    %c0_25 = arith.constant 0 : index
    %c0_26 = arith.constant 0 : index
    %50 = vector.load %arg5[%c0_25, %c0_26] : memref<32x32xbf16, #tpu.memory_space<vmem>>, vector<32x32xbf16>
    %cst_27 = arith.constant dense<0.000000e+00> : vector<128x32xf32>
    %51 = tpu.matmul %49, %50, %cst_27 {dimension_numbers = #tpu.dot_dimension_numbers<[1], [0], [0], [1], [0, 0, 1, 1], [], []>} : vector<128x32xbf16>, vector<32x32xbf16>, vector<128x32xf32> -> vector<128x32xf32>
    %c0_28 = arith.constant 0 : index
    %c0_29 = arith.constant 0 : index
    %c0_30 = arith.constant 0 : index
    %52 = vector.load %arg6[%c0_28, %c0_29, %c0_30] : memref<1x128x32xf32, #tpu.memory_space<vmem>>, vector<1x128x32xf32>
    %53 = vector.shape_cast %52 : vector<1x128x32xf32> to vector<128x32xf32>
    %54 = vector.shape_cast %51 : vector<128x32xf32> to vector<1x128x32xf32>
    tpu.vector_store %arg6[%c0_28, %c0_29, %c0_30], %54 {strides = array<i32>} : memref<1x128x32xf32, #tpu.memory_space<vmem>>, vector<1x128x32xf32>,
    return
  }
  func.func @transform_0(%arg0: i32, %arg1: i32) -> (i32, i32, i32, i32) {
    %c0_i32 = arith.constant 0 : i32
    %c0_i32_0 = arith.constant 0 : i32
    %c0_i32_1 = arith.constant 0 : i32
    %c0_i32_2 = arith.constant 0 : i32
    return %arg0, %c0_i32, %c0_i32_0, %c0_i32_1 : i32, i32, i32, i32
  }
  func.func @transform_1(%arg0: i32, %arg1: i32) -> (i32, i32) {
    %c0_i32 = arith.constant 0 : i32
    %c0_i32_0 = arith.constant 0 : i32
    %c0_i32_1 = arith.constant 0 : i32
    return %c0_i32, %c0_i32_0 : i32, i32
  }
  func.func @transform_2(%arg0: i32, %arg1: i32) -> (i32, i32) {
    %c0_i32 = arith.constant 0 : i32
    %c0_i32_0 = arith.constant 0 : i32
    %c0_i32_1 = arith.constant 0 : i32
    return %c0_i32, %c0_i32_0 : i32, i32
  }
  func.func @transform_3(%arg0: i32, %arg1: i32) -> (i32, i32) {
    %c0_i32 = arith.constant 0 : i32
    %c0_i32_0 = arith.constant 0 : i32
    %c0_i32_1 = arith.constant 0 : i32
    return %c0_i32, %c0_i32_0 : i32, i32
  }
  func.func @transform_4(%arg0: i32, %arg1: i32) -> (i32, i32, i32) {
    %c0_i32 = arith.constant 0 : i32
    %c0_i32_0 = arith.constant 0 : i32
    return %arg0, %arg1, %c0_i32 : i32, i32, i32
  }
}

</mosaic_0001>

<llo_original>
// kernel: conv_attention.1
$region0: #{conv_attention.1}
  #allocation0 [shape = 'u32[]', space=smem, size = 0x4, offset = 0x4, fixed_abs, tag = 'smem constant byte address 0x4 - core index']
  #allocation1 [shape = 'u32[72,128]{1,0:T(1,128)}', space=vmem, size = 0x9000, scoped, tag = 'internal scratch']
  #allocation2 [shape = 'bf16[128,288]{1,0:T(8,128)(2,1)}', space=vmem, size = 0x18000, scoped, tag = 'scratch operand']
  %s0 = inlined_call_operand.vmem [shape: bf16[2,18,18,32], index: 0, kind: input, shape index: {}]
  %s1 = inlined_call_operand.vmem [shape: bf16[288,32], index: 1, kind: input, shape index: {}]
  %s2 = inlined_call_operand.vmem [shape: f32[1,32], index: 2, kind: input, shape index: {}]
  %s3 = inlined_call_operand.vmem [shape: bf16[32,32], index: 3, kind: input, shape index: {}]
  %s4 = inlined_call_operand.hbm [shape: f32[2,256,32], index: 4, kind: output, shape index: {}]
  %s5 = sld [smem:[#allocation0]]
  $region49: #{conv_attention.1} parent=0
    _
  %s7 = ssub.s32 1, %s5
  %s8 = scalar_select 0, %s7, %s5
  $region1: #{conv_attention.1} parent=0
    #allocation3 [shape = 'u8[131072]{0}', space=vmem, size = 0x20000, scoped, tag = 'output window, operand 0']
    #allocation4 [shape = 's32[2]{0}', space=sflag, size = 0x8, scoped, tag = 'scoped memory for conv_attention.1']
    %9 = vsyncpa [#allocation4], 0
    %s10 = scalar_lea.sflag [#allocation4], 1
    %11 = vsyncpa %s10, 0
    loop: start=0, step=1, limit=6
    $region2: #{conv_attention.1} parent=1 // loop_pre_header
      _
    $region3: #{conv_attention.1} parent=1 // loop_header
      %s13 = sphi 0, %s17
      %p14 = scmp.ge.s32.totalorder %s13, 6
      %s20 = sphi 0, %s32
      %s21 = sphi 0, %s28
      %s22 = sphi 0, %s20
      %s23 = sphi 0, %s21
      %s24 = sphi 0, %s22
      %s25 = sphi 0, %s23
      %s35 = sphi 0, %s37
      %s38 = sphi 0, %s35
      %s39 = sphi 0, %s38
      %s55 = sphi 0, %s39
      %s59 = sphi 0, %s59
      %s61 = sphi 0, %s59
      %s62 = sphi 0, %s61
      %s76 = sphi 0, %s62
      %s80 = sphi 0, %s80
      %s82 = sphi 0, %s80
      %s83 = sphi 0, %s82
      %s97 = sphi 0, %s83
      %s101 = sphi 0, %s101
      %s103 = sphi 0, %s101
      %s104 = sphi 0, %s103
      %s118 = sphi 0, %s104
      %s126 = sphi 0, %s128
      %s129 = sphi 0, %s126
      %s130 = sphi 0, %s129
      %s146 = sphi 0, %s130
    $region4: #{conv_attention.1} parent=1 // loop_header_branch
      %16 = sbr.rel (%p14) target = $region8
    $region5: #{conv_attention.1} parent=1 // loop_body
      %s18 = ssub.s32 %s13, 1
      %s19 = ssub.s32 %s13, 2
      %s26 = sadd.s32 1, %s21
      %p27 = scmp.ge.s32.totalorder %s26, 2
      %s28 = scalar_select %p27, 0, %s26
      %s29 = sadd.s32 1, %s20
      %s30 = scalar_select %p27, %s29, %s20
      %p31 = scmp.ge.s32.totalorder %s30, 2
      %s32 = scalar_select %p31, 0, %s30
      %s33 = ssub.s32 %s20, %s32
      %p34 = scmp.eq.s32.totalorder %s33, 0
      %s36 = sadd.s32 %s35, 1
      %s37 = scalar_select %p34, %s35, %s36
      %p40 = pneg %p34
      %p41 = scmp.eq.s32.totalorder %s13, 3
      %p42 = por %p40, %p41
      %p43 = scmp.ne.s32.totalorder %s35, %s38
      %p44 = scmp.eq.s32.totalorder %s13, 0
      %p45 = por %p43, %p44
      %p46 = scmp.ne.s32.totalorder %s35, %s38
      %p47 = scmp.eq.s32.totalorder %s18, 3
      %p48 = por %p46, %p47
      %p49 = scmp.ne.s32.totalorder %s38, %s39
      %p50 = scmp.eq.s32.totalorder %s18, 0
      %p51 = por %p49, %p50
      %p52 = scmp.ne.s32.totalorder %s38, %s39
      %p53 = scmp.eq.s32.totalorder %s19, 3
      %p54 = por %p52, %p53
      %p56 = scmp.ne.s32.totalorder %s39, %s55
      %p57 = scmp.eq.s32.totalorder %s19, 0
      %p58 = por %p56, %p57
      %s60 = sadd.s32 %s59, 1
      %p63 = scmp.eq.s32.totalorder %s13, 3
      %p64 = scmp.ne.s32.totalorder %s59, %s61
      %p65 = scmp.eq.s32.totalorder %s13, 0
      %p66 = por %p64, %p65
      %p67 = scmp.ne.s32.totalorder %s59, %s61
      %p68 = scmp.eq.s32.totalorder %s18, 3
      %p69 = por %p67, %p68
      %p70 = scmp.ne.s32.totalorder %s61, %s62
      %p71 = scmp.eq.s32.totalorder %s18, 0
      %p72 = por %p70, %p71
      %p73 = scmp.ne.s32.totalorder %s61, %s62
      %p74 = scmp.eq.s32.totalorder %s19, 3
      %p75 = por %p73, %p74
      %p77 = scmp.ne.s32.totalorder %s62, %s76
      %p78 = scmp.eq.s32.totalorder %s19, 0
      %p79 = por %p77, %p78
      %s81 = sadd.s32 %s80, 1
      %p84 = scmp.eq.s32.totalorder %s13, 3
      %p85 = scmp.ne.s32.totalorder %s80, %s82
      %p86 = scmp.eq.s32.totalorder %s13, 0
      %p87 = por %p85, %p86
      %p88 = scmp.ne.s32.totalorder %s80, %s82
      %p89 = scmp.eq.s32.totalorder %s18, 3
      %p90 = por %p88, %p89
      %p91 = scmp.ne.s32.totalorder %s82, %s83
      %p92 = scmp.eq.s32.totalorder %s18, 0
      %p93 = por %p91, %p92
      %p94 = scmp.ne.s32.totalorder %s82, %s83
      %p95 = scmp.eq.s32.totalorder %s19, 3
      %p96 = por %p94, %p95
      %p98 = scmp.ne.s32.totalorder %s83, %s97
      %p99 = scmp.eq.s32.totalorder %s19, 0
      %p100 = por %p98, %p99
      %s102 = sadd.s32 %s101, 1
      %p105 = scmp.eq.s32.totalorder %s13, 3
      %p106 = scmp.ne.s32.totalorder %s101, %s103
      %p107 = scmp.eq.s32.totalorder %s13, 0
      %p108 = por %p106, %p107
      %p109 = scmp.ne.s32.totalorder %s101, %s103
      %p110 = scmp.eq.s32.totalorder %s18, 3
      %p111 = por %p109, %p110
      %p112 = scmp.ne.s32.totalorder %s103, %s104
      %p113 = scmp.eq.s32.totalorder %s18, 0
      %p114 = por %p112, %p113
      %p115 = scmp.ne.s32.totalorder %s103, %s104
      %p116 = scmp.eq.s32.totalorder %s19, 3
      %p117 = por %p115, %p116
      %p119 = scmp.ne.s32.totalorder %s104, %s118
      %p120 = scmp.eq.s32.totalorder %s19, 0
      %p121 = por %p119, %p120
      %s122 = ssub.s32 %s20, %s32
      %s123 = ssub.s32 %s21, %s28
      %s124 = sor.u32 %s122, %s123
      %p125 = scmp.eq.s32.totalorder %s124, 0
      %s127 = sadd.s32 %s126, 1
      %s128 = scalar_select %p125, %s126, %s127
      %p131 = pneg %p125
      %p132 = scmp.eq.s32.totalorder %s13, 3
      %p133 = por %p131, %p132
      %p134 = scmp.ne.s32.totalorder %s126, %s129
      %p135 = scmp.eq.s32.totalorder %s13, 0
      %p136 = por %p134, %p135
      %p137 = scmp.ne.s32.totalorder %s126, %s129
      %p138 = scmp.eq.s32.totalorder %s18, 3
      %p139 = por %p137, %p138
      %p140 = scmp.ne.s32.totalorder %s129, %s130
      %p141 = scmp.eq.s32.totalorder %s18, 0
      %p142 = por %p140, %p141
      %p143 = scmp.ne.s32.totalorder %s129, %s130
      %p144 = scmp.eq.s32.totalorder %s19, 3
      %p145 = por %p143, %p144
      %p147 = scmp.ne.s32.totalorder %s130, %s146
      %p148 = scmp.eq.s32.totalorder %s19, 0
      %p149 = por %p147, %p148
      %p150 = scmp.le.s32.totalorder 1, %s13
      %p151 = scmp.lt.s32.totalorder %s13, 5
      %p152 = pnand %p150, %p151
      %p153 = pneg %p152
      // Predicated region
      $region9: #{conv_attention.1} parent=5 // pred_check
        _
      $region10: #{conv_attention.1} parent=5 // pred_check_branch
        %155 = sbr.rel (%p152) target = $region12
      $region11: #{conv_attention.1} parent=5 // pred_region
        %s156 = ssub.s32 %s13, 1
        // Predicated region
        $region13: #{conv_attention.1} parent=11 // pred_check
          %p157 = pneg %p72
        $region14: #{conv_attention.1} parent=11 // pred_check_branch
          %159 = sbr.rel (%p157) target = $region16
        $region15: #{conv_attention.1} parent=11 // pred_region
          _
        $region16: #{conv_attention.1} parent=11 // pred_fallthru
          _
        // Predicated region
        $region17: #{conv_attention.1} parent=11 // pred_check
          %p160 = pneg %p93
        $region18: #{conv_attention.1} parent=11 // pred_check_branch
          %162 = sbr.rel (%p160) target = $region20
        $region19: #{conv_attention.1} parent=11 // pred_region
          _
        $region20: #{conv_attention.1} parent=11 // pred_fallthru
          _
        // Predicated region
        $region21: #{conv_attention.1} parent=11 // pred_check
          %p163 = pneg %p114
        $region22: #{conv_attention.1} parent=11 // pred_check_branch
          %165 = sbr.rel (%p163) target = $region24
        $region23: #{conv_attention.1} parent=11 // pred_region
          _
        $region24: #{conv_attention.1} parent=11 // pred_fallthru
          _
      $region12: #{conv_attention.1} parent=5 // pred_fallthru
        _
      %p166 = scmp.lt.s32.totalorder %s13, 4
      // Predicated region
      $region25: #{conv_attention.1} parent=5 // pred_check
        %p167 = pneg %p166
      $region26: #{conv_attention.1} parent=5 // pred_check_branch
        %169 = sbr.rel (%p167) target = $region28
      $region27: #{conv_attention.1} parent=5 // pred_region
        // Predicated region
        $region29: #{conv_attention.1} parent=27 // pred_check
          %p170 = pneg %p45
        $region30: #{conv_attention.1} parent=27 // pred_check_branch
          %172 = sbr.rel (%p170) target = $region32
        $region31: #{conv_attention.1} parent=27 // pred_region
          %p173 = scmp.lt.s32.totalorder %s20, 1
          %s174 = scalar_select %p173, %s20, 1
          %s175 = smul.addr %s174, 54
          %s176 = smul.addr %s175, 4
          %s177 = scalar_lea.vmem %s0, %s176
        $region32: #{conv_attention.1} parent=27 // pred_fallthru
          _
      $region28: #{conv_attention.1} parent=5 // pred_fallthru
        _
      %p178 = scmp.le.s32.totalorder 1, %s13
      %p179 = scmp.lt.s32.totalorder %s13, 5
      %p180 = pnand %p178, %p179
      %p181 = pneg %p180
      // Predicated region
      $region33: #{conv_attention.1} parent=5 // pred_check
        _
      $region34: #{conv_attention.1} parent=5 // pred_check_branch
        %183 = sbr.rel (%p180) target = $region36
      $region35: #{conv_attention.1} parent=5 // pred_region
        %s184 = ssub.s32 %s13, 1
        %p185 = scmp.lt.s32.totalorder %s22, 1
        %s186 = scalar_select %p185, %s22, 1
        %s187 = smul.addr %s186, 54
        %s188 = smul.addr %s187, 4
        %s189 = scalar_lea.vmem %s0, %s188
        %p190 = pneg %p51
        %p191 = pneg %p48
        %p192 = pneg %p72
        %p193 = pneg %p69
        %p194 = pneg %p93
        %p195 = pneg %p90
        %p196 = pneg %p114
        %p197 = pneg %p111
        %p198 = pneg %p142
        %p199 = pneg %p139
        %s200 = sand.u32 %s129, 1
        %s201 = scalar_lea.sflag [#allocation4], %s200
        %s202 = sand.u32 %s129, 1
        %s203 = smul.addr %s202, 128
        %s204 = scalar_lea.vmem [#allocation3], %s203
        %p205 = scmp.lt.s32.totalorder %s22, 1
        %s206 = scalar_select %p205, %s22, 1
        %s207 = smul.addr %s206, 54
        %s208 = smul.addr %s207, 4
        %s209 = scalar_lea.vmem %s0, %s208
        %s210 = smul.u32 16, %s23
        %s212 = smul.u32 %s23, 8
        %s213 = smul.u32 %s212, 3
        %s214 = smul.addr %s213, 4
        %s215 = scalar_lea.vmem %s209, %s214
        %v216 = vld [vmem:[%s215] sm:$0xf]
        %v217 = vld [vmem:[%s215 + $0x4] sm:$0xf]
        %v218 = vld [vmem:[%s215 + $0x8] sm:$0x1]
        %v219 = vld [vmem:[%s215 + $0xc] sm:$0xf]
        %v220 = vld [vmem:[%s215 + $0x10] sm:$0xf]
        %v221 = vld [vmem:[%s215 + $0x14] sm:$0x1]
        %v222 = vld [vmem:[%s215 + $0x18] sm:$0xf]
        %v223 = vld [vmem:[%s215 + $0x1c] sm:$0xf]
        %v224 = vld [vmem:[%s215 + $0x20] sm:$0x1]
        %v225 = vld [vmem:[%s215 + $0x24] sm:$0xf]
        %v226 = vld [vmem:[%s215 + $0x28] sm:$0xf]
        %v227 = vld [vmem:[%s215 + $0x2c] sm:$0x1]
        %v228 = vld [vmem:[%s215 + $0x30] sm:$0xf]
        %v229 = vld [vmem:[%s215 + $0x34] sm:$0xf]
        %v230 = vld [vmem:[%s215 + $0x38] sm:$0x1]
        %v231 = vld [vmem:[%s215 + $0x3c] sm:$0xf]
        %v232 = vld [vmem:[%s215 + $0x40] sm:$0xf]
        %v233 = vld [vmem:[%s215 + $0x44] sm:$0x1]
        %v234 = vld [vmem:[%s215 + $0x48] sm:$0xf]
        %v235 = vld [vmem:[%s215 + $0x4c] sm:$0xf]
        %v236 = vld [vmem:[%s215 + $0x50] sm:$0x1]
        %v237 = vld [vmem:[%s215 + $0x54] sm:$0xf]
        %v238 = vld [vmem:[%s215 + $0x58] sm:$0xf]
        %v239 = vld [vmem:[%s215 + $0x5c] sm:$0x1]
        %vm240 = vcmask 257024
        %241 = vst.msk [vmem:[#allocation2] sm:$0xf] %vm240, %v216
        %242 = vst.msk [vmem:[#allocation2 + $0xc] sm:$0xf] %vm240, %v217
        %243 = vst.msk [vmem:[#allocation2 + $0x18] sm:$0xf] %vm240, %v219
        %244 = vst.msk [vmem:[#allocation2 + $0x24] sm:$0xf] %vm240, %v220
        %245 = vst.msk [vmem:[#allocation2 + $0x30] sm:$0xf] %vm240, %v222
        %246 = vst.msk [vmem:[#allocation2 + $0x3c] sm:$0xf] %vm240, %v223
        %247 = vst.msk [vmem:[#allocation2 + $0x48] sm:$0xf] %vm240, %v225
        %248 = vst.msk [vmem:[#allocation2 + $0x54] sm:$0xf] %vm240, %v226
        %249 = vst.msk [vmem:[#allocation2 + $0x60] sm:$0xf] %vm240, %v228
        %250 = vst.msk [vmem:[#allocation2 + $0x6c] sm:$0xf] %vm240, %v229
        %251 = vst.msk [vmem:[#allocation2 + $0x78] sm:$0xf] %vm240, %v231
        %252 = vst.msk [vmem:[#allocation2 + $0x84] sm:$0xf] %vm240, %v232
        %253 = vst.msk [vmem:[#allocation2 + $0x90] sm:$0xf] %vm240, %v234
        %254 = vst.msk [vmem:[#allocation2 + $0x9c] sm:$0xf] %vm240, %v235
        %255 = vst.msk [vmem:[#allocation2 + $0xa8] sm:$0xf] %vm240, %v237
        %256 = vst.msk [vmem:[#allocation2 + $0xb4] sm:$0xf] %vm240, %v238
        %vm257 = vsmask.f32 3328
        %vm258 = vsmask.f32 7440
        %vm259 = vmor %vm257, %vm258
        %v261 = vshrl.u32 %v216, 16
        %v263 = vrot.slane %v261, 4
        %v264 = vshll.u32 %v216, 16
        %v266 = vrot.slane %v264, 5
        %v267 = vor.u32 %v263, %v266
        %v268 = vrot.slane %v267, 4
        %v270 = vshll.u32 %v217, 16
        %v272 = vrot.slane %v270, 5
        %v273 = vsel %vm259, %v268, %v272
        %v274 = vshrl.u32 %v217, 16
        %v276 = vrot.slane %v274, 4
        %v277 = vor.u32 %v276, %v272
        %v278 = vrot.slane %v277, 4
        %v280 = vshll.u32 %v218, 16
        %v282 = vrot.slane %v280, 5
        %v283 = vsel %vm259, %v278, %v282
        %v285 = vshrl.u32 %v219, 16
        %v287 = vrot.slane %v285, 4
        %v288 = vshll.u32 %v219, 16
        %v290 = vrot.slane %v288, 5
        %v291 = vor.u32 %v287, %v290
        %v292 = vrot.slane %v291, 4
        %v294 = vshll.u32 %v220, 16
        %v296 = vrot.slane %v294, 5
        %v297 = vsel %vm259, %v292, %v296
        %v298 = vshrl.u32 %v220, 16
        %v300 = vrot.slane %v298, 4
        %v301 = vor.u32 %v300, %v296
        %v302 = vrot.slane %v301, 4
        %v304 = vshll.u32 %v221, 16
        %v306 = vrot.slane %v304, 5
        %v307 = vsel %vm259, %v302, %v306
        %v309 = vshrl.u32 %v222, 16
        %v311 = vrot.slane %v309, 4
        %v312 = vshll.u32 %v222, 16
        %v314 = vrot.slane %v312, 5
        %v315 = vor.u32 %v311, %v314
        %v316 = vrot.slane %v315, 4
        %v318 = vshll.u32 %v223, 16
        %v320 = vrot.slane %v318, 5
        %v321 = vsel %vm259, %v316, %v320
        %v322 = vshrl.u32 %v223, 16
        %v324 = vrot.slane %v322, 4
        %v325 = vor.u32 %v324, %v320
        %v326 = vrot.slane %v325, 4
        %v328 = vshll.u32 %v224, 16
        %v330 = vrot.slane %v328, 5
        %v331 = vsel %vm259, %v326, %v330
        %v333 = vshrl.u32 %v225, 16
        %v335 = vrot.slane %v333, 4
        %v336 = vshll.u32 %v225, 16
        %v338 = vrot.slane %v336, 5
        %v339 = vor.u32 %v335, %v338
        %v340 = vrot.slane %v339, 4
        %v342 = vshll.u32 %v226, 16
        %v344 = vrot.slane %v342, 5
        %v345 = vsel %vm259, %v340, %v344
        %v346 = vshrl.u32 %v226, 16
        %v348 = vrot.slane %v346, 4
        %v349 = vor.u32 %v348, %v344
        %v350 = vrot.slane %v349, 4
        %v352 = vshll.u32 %v227, 16
        %v354 = vrot.slane %v352, 5
        %v355 = vsel %vm259, %v350, %v354
        %v357 = vshrl.u32 %v228, 16
        %v359 = vrot.slane %v357, 4
        %v360 = vshll.u32 %v228, 16
        %v362 = vrot.slane %v360, 5
        %v363 = vor.u32 %v359, %v362
        %v364 = vrot.slane %v363, 4
        %v366 = vshll.u32 %v229, 16
        %v368 = vrot.slane %v366, 5
        %v369 = vsel %vm259, %v364, %v368
        %v370 = vshrl.u32 %v229, 16
        %v372 = vrot.slane %v370, 4
        %v373 = vor.u32 %v372, %v368
        %v374 = vrot.slane %v373, 4
        %v376 = vshll.u32 %v230, 16
        %v378 = vrot.slane %v376, 5
        %v379 = vsel %vm259, %v374, %v378
        %v381 = vshrl.u32 %v231, 16
        %v383 = vrot.slane %v381, 4
        %v384 = vshll.u32 %v231, 16
        %v386 = vrot.slane %v384, 5
        %v387 = vor.u32 %v383, %v386
        %v388 = vrot.slane %v387, 4
        %v390 = vshll.u32 %v232, 16
        %v392 = vrot.slane %v390, 5
        %v393 = vsel %vm259, %v388, %v392
        %v394 = vshrl.u32 %v232, 16
        %v396 = vrot.slane %v394, 4
        %v397 = vor.u32 %v396, %v392
        %v398 = vrot.slane %v397, 4
        %v400 = vshll.u32 %v233, 16
        %v402 = vrot.slane %v400, 5
        %v403 = vsel %vm259, %v398, %v402
        %v405 = vshrl.u32 %v234, 16
        %v407 = vrot.slane %v405, 4
        %v408 = vshll.u32 %v234, 16
        %v410 = vrot.slane %v408, 5
        %v411 = vor.u32 %v407, %v410
        %v412 = vrot.slane %v411, 4
        %v414 = vshll.u32 %v235, 16
        %v416 = vrot.slane %v414, 5
        %v417 = vsel %vm259, %v412, %v416
        %v418 = vshrl.u32 %v235, 16
        %v420 = vrot.slane %v418, 4
        %v421 = vor.u32 %v420, %v416
        %v422 = vrot.slane %v421, 4
        %v424 = vshll.u32 %v236, 16
        %v426 = vrot.slane %v424, 5
        %v427 = vsel %vm259, %v422, %v426
        %v429 = vshrl.u32 %v237, 16
        %v431 = vrot.slane %v429, 4
        %v432 = vshll.u32 %v237, 16
        %v434 = vrot.slane %v432, 5
        %v435 = vor.u32 %v431, %v434
        %v436 = vrot.slane %v435, 4
        %v438 = vshll.u32 %v238, 16
        %v440 = vrot.slane %v438, 5
        %v441 = vsel %vm259, %v436, %v440
        %v442 = vshrl.u32 %v238, 16
        %v444 = vrot.slane %v442, 4
        %v445 = vor.u32 %v444, %v440
        %v446 = vrot.slane %v445, 4
        %v448 = vshll.u32 %v239, 16
        %v450 = vrot.slane %v448, 5
        %v451 = vsel %vm259, %v446, %v450
        %452 = vrot.lane.b32.xlu0 %v273, 32
        %v453 = vpop.permute.xlu0 %452
        %454 = vrot.lane.b32.xlu0 %v283, 32
        %v455 = vpop.permute.xlu0 %454
        %456 = vrot.lane.b32.xlu0 %v297, 32
        %v457 = vpop.permute.xlu0 %456
        %458 = vrot.lane.b32.xlu0 %v307, 32
        %v459 = vpop.permute.xlu0 %458
        %460 = vrot.lane.b32.xlu0 %v321, 32
        %v461 = vpop.permute.xlu0 %460
        %462 = vrot.lane.b32.xlu0 %v331, 32
        %v463 = vpop.permute.xlu0 %462
        %464 = vrot.lane.b32.xlu0 %v345, 32
        %v465 = vpop.permute.xlu0 %464
        %466 = vrot.lane.b32.xlu0 %v355, 32
        %v467 = vpop.permute.xlu0 %466
        %468 = vrot.lane.b32.xlu0 %v369, 32
        %v469 = vpop.permute.xlu0 %468
        %470 = vrot.lane.b32.xlu0 %v379, 32
        %v471 = vpop.permute.xlu0 %470
        %472 = vrot.lane.b32.xlu0 %v393, 32
        %v473 = vpop.permute.xlu0 %472
        %474 = vrot.lane.b32.xlu0 %v403, 32
        %v475 = vpop.permute.xlu0 %474
        %476 = vrot.lane.b32.xlu0 %v417, 32
        %v477 = vpop.permute.xlu0 %476
        %478 = vrot.lane.b32.xlu0 %v427, 32
        %v479 = vpop.permute.xlu0 %478
        %480 = vrot.lane.b32.xlu0 %v441, 32
        %v481 = vpop.permute.xlu0 %480
        %482 = vrot.lane.b32.xlu0 %v451, 32
        %v483 = vpop.permute.xlu0 %482
        %vm500 = vcmask 519424
        %501 = vst.msk [vmem:[#allocation2] sm:$0xf] %vm500, %v453
        %502 = vst.msk [vmem:[#allocation2 + $0xc] sm:$0xf] %vm500, %v455
        %503 = vst.msk [vmem:[#allocation2 + $0x18] sm:$0xf] %vm500, %v457
        %504 = vst.msk [vmem:[#allocation2 + $0x24] sm:$0xf] %vm500, %v459
        %505 = vst.msk [vmem:[#allocation2 + $0x30] sm:$0xf] %vm500, %v461
        %506 = vst.msk [vmem:[#allocation2 + $0x3c] sm:$0xf] %vm500, %v463
        %507 = vst.msk [vmem:[#allocation2 + $0x48] sm:$0xf] %vm500, %v465
        %508 = vst.msk [vmem:[#allocation2 + $0x54] sm:$0xf] %vm500, %v467
        %509 = vst.msk [vmem:[#allocation2 + $0x60] sm:$0xf] %vm500, %v469
        %510 = vst.msk [vmem:[#allocation2 + $0x6c] sm:$0xf] %vm500, %v471
        %511 = vst.msk [vmem:[#allocation2 + $0x78] sm:$0xf] %vm500, %v473
        %512 = vst.msk [vmem:[#allocation2 + $0x84] sm:$0xf] %vm500, %v475
        %513 = vst.msk [vmem:[#allocation2 + $0x90] sm:$0xf] %vm500, %v477
        %514 = vst.msk [vmem:[#allocation2 + $0x9c] sm:$0xf] %vm500, %v479
        %515 = vst.msk [vmem:[#allocation2 + $0xa8] sm:$0xf] %vm500, %v481
        %516 = vst.msk [vmem:[#allocation2 + $0xb4] sm:$0xf] %vm500, %v483
        %vm541 = vcmask 1042432
        %vm542 = vcmask 1046532
        %vm543 = vmor %vm541, %vm542
        %v544 = vrot.slane %v216, 5
        %v545 = vrot.slane %v544, 4
        %v546 = vrot.slane %v217, 5
        %v547 = vsel %vm543, %v545, %v546
        %v548 = vrot.slane %v546, 4
        %v549 = vrot.slane %v218, 5
        %v550 = vsel %vm543, %v548, %v549
        %v551 = vrot.slane %v219, 5
        %v552 = vrot.slane %v551, 4
        %v553 = vrot.slane %v220, 5
        %v554 = vsel %vm543, %v552, %v553
        %v555 = vrot.slane %v553, 4
        %v556 = vrot.slane %v221, 5
        %v557 = vsel %vm543, %v555, %v556
        %v558 = vrot.slane %v222, 5
        %v559 = vrot.slane %v558, 4
        %v560 = vrot.slane %v223, 5
        %v561 = vsel %vm543, %v559, %v560
        %v562 = vrot.slane %v560, 4
        %v563 = vrot.slane %v224, 5
        %v564 = vsel %vm543, %v562, %v563
        %v565 = vrot.slane %v225, 5
        %v566 = vrot.slane %v565, 4
        %v567 = vrot.slane %v226, 5
        %v568 = vsel %vm543, %v566, %v567
        %v569 = vrot.slane %v567, 4
        %v570 = vrot.slane %v227, 5
        %v571 = vsel %vm543, %v569, %v570
        %v572 = vrot.slane %v228, 5
        %v573 = vrot.slane %v572, 4
        %v574 = vrot.slane %v229, 5
        %v575 = vsel %vm543, %v573, %v574
        %v576 = vrot.slane %v574, 4
        %v577 = vrot.slane %v230, 5
        %v578 = vsel %vm543, %v576, %v577
        %v579 = vrot.slane %v231, 5
        %v580 = vrot.slane %v579, 4
        %v581 = vrot.slane %v232, 5
        %v582 = vsel %vm543, %v580, %v581
        %v583 = vrot.slane %v581, 4
        %v584 = vrot.slane %v233, 5
        %v585 = vsel %vm543, %v583, %v584
        %v586 = vrot.slane %v234, 5
        %v587 = vrot.slane %v586, 4
        %v588 = vrot.slane %v235, 5
        %v589 = vsel %vm543, %v587, %v588
        %v590 = vrot.slane %v588, 4
        %v591 = vrot.slane %v236, 5
        %v592 = vsel %vm543, %v590, %v591
        %v593 = vrot.slane %v237, 5
        %v594 = vrot.slane %v593, 4
        %v595 = vrot.slane %v238, 5
        %v596 = vsel %vm543, %v594, %v595
        %v597 = vrot.slane %v595, 4
        %v598 = vrot.slane %v239, 5
        %v599 = vsel %vm543, %v597, %v598
        %600 = vrot.lane.b32.xlu0 %v547, 64
        %v601 = vpop.permute.xlu0 %600
        %602 = vrot.lane.b32.xlu0 %v550, 64
        %v603 = vpop.permute.xlu0 %602
        %604 = vrot.lane.b32.xlu0 %v554, 64
        %v605 = vpop.permute.xlu0 %604
        %606 = vrot.lane.b32.xlu0 %v557, 64
        %v607 = vpop.permute.xlu0 %606
        %608 = vrot.lane.b32.xlu0 %v561, 64
        %v609 = vpop.permute.xlu0 %608
        %610 = vrot.lane.b32.xlu0 %v564, 64
        %v611 = vpop.permute.xlu0 %610
        %612 = vrot.lane.b32.xlu0 %v568, 64
        %v613 = vpop.permute.xlu0 %612
        %614 = vrot.lane.b32.xlu0 %v571, 64
        %v615 = vpop.permute.xlu0 %614
        %616 = vrot.lane.b32.xlu0 %v575, 64
        %v617 = vpop.permute.xlu0 %616
        %618 = vrot.lane.b32.xlu0 %v578, 64
        %v619 = vpop.permute.xlu0 %618
        %620 = vrot.lane.b32.xlu0 %v582, 64
        %v621 = vpop.permute.xlu0 %620
        %622 = vrot.lane.b32.xlu0 %v585, 64
        %v623 = vpop.permute.xlu0 %622
        %624 = vrot.lane.b32.xlu0 %v589, 64
        %v625 = vpop.permute.xlu0 %624
        %626 = vrot.lane.b32.xlu0 %v592, 64
        %v627 = vpop.permute.xlu0 %626
        %628 = vrot.lane.b32.xlu0 %v596, 64
        %v629 = vpop.permute.xlu0 %628
        %630 = vrot.lane.b32.xlu0 %v599, 64
        %v631 = vpop.permute.xlu0 %630
        %vm648 = vcmask 781824
        %649 = vst.msk [vmem:[#allocation2] sm:$0xf] %vm648, %v601
        %650 = vst.msk [vmem:[#allocation2 + $0xc] sm:$0xf] %vm648, %v603
        %651 = vst.msk [vmem:[#allocation2 + $0x18] sm:$0xf] %vm648, %v605
        %652 = vst.msk [vmem:[#allocation2 + $0x24] sm:$0xf] %vm648, %v607
        %653 = vst.msk [vmem:[#allocation2 + $0x30] sm:$0xf] %vm648, %v609
        %654 = vst.msk [vmem:[#allocation2 + $0x3c] sm:$0xf] %vm648, %v611
        %655 = vst.msk [vmem:[#allocation2 + $0x48] sm:$0xf] %vm648, %v613
        %656 = vst.msk [vmem:[#allocation2 + $0x54] sm:$0xf] %vm648, %v615
        %657 = vst.msk [vmem:[#allocation2 + $0x60] sm:$0xf] %vm648, %v617
        %658 = vst.msk [vmem:[#allocation2 + $0x6c] sm:$0xf] %vm648, %v619
        %659 = vst.msk [vmem:[#allocation2 + $0x78] sm:$0xf] %vm648, %v621
        %660 = vst.msk [vmem:[#allocation2 + $0x84] sm:$0xf] %vm648, %v623
        %661 = vst.msk [vmem:[#allocation2 + $0x90] sm:$0xf] %vm648, %v625
        %662 = vst.msk [vmem:[#allocation2 + $0x9c] sm:$0xf] %vm648, %v627
        %663 = vst.msk [vmem:[#allocation2 + $0xa8] sm:$0xf] %vm648, %v629
        %664 = vst.msk [vmem:[#allocation2 + $0xb4] sm:$0xf] %vm648, %v631
        %s665 = sadd.s32 %s212, 1
        %s666 = smul.u32 %s665, 3
        %s667 = smul.addr %s666, 4
        %s668 = scalar_lea.vmem %s209, %s667
        %v669 = vld [vmem:[%s668] sm:$0xf]
        %v670 = vld [vmem:[%s668 + $0x4] sm:$0xf]
        %v671 = vld [vmem:[%s668 + $0x8] sm:$0x1]
        %v672 = vld [vmem:[%s668 + $0xc] sm:$0xf]
        %v673 = vld [vmem:[%s668 + $0x10] sm:$0xf]
        %v674 = vld [vmem:[%s668 + $0x14] sm:$0x1]
        %v675 = vld [vmem:[%s668 + $0x18] sm:$0xf]
        %v676 = vld [vmem:[%s668 + $0x1c] sm:$0xf]
        %v677 = vld [vmem:[%s668 + $0x20] sm:$0x1]
        %v678 = vld [vmem:[%s668 + $0x24] sm:$0xf]
        %v679 = vld [vmem:[%s668 + $0x28] sm:$0xf]
        %v680 = vld [vmem:[%s668 + $0x2c] sm:$0x1]
        %v681 = vld [vmem:[%s668 + $0x30] sm:$0xf]
        %v682 = vld [vmem:[%s668 + $0x34] sm:$0xf]
        %v683 = vld [vmem:[%s668 + $0x38] sm:$0x1]
        %v684 = vld [vmem:[%s668 + $0x3c] sm:$0xf]
        %v685 = vld [vmem:[%s668 + $0x40] sm:$0xf]
        %v686 = vld [vmem:[%s668 + $0x44] sm:$0x1]
        %v687 = vld [vmem:[%s668 + $0x48] sm:$0xf]
        %v688 = vld [vmem:[%s668 + $0x4c] sm:$0xf]
        %v689 = vld [vmem:[%s668 + $0x50] sm:$0x1]
        %v690 = vld [vmem:[%s668 + $0x54] sm:$0xf]
        %v691 = vld [vmem:[%s668 + $0x58] sm:$0xf]
        %v692 = vld [vmem:[%s668 + $0x5c] sm:$0x1]
        %709 = vrot.lane.b32.xlu0 %v669, 96
        %v710 = vpop.permute.xlu0 %709
        %711 = vrot.lane.b32.xlu0 %v670, 96
        %v712 = vpop.permute.xlu0 %711
        %713 = vrot.lane.b32.xlu0 %v672, 96
        %v714 = vpop.permute.xlu0 %713
        %715 = vrot.lane.b32.xlu0 %v673, 96
        %v716 = vpop.permute.xlu0 %715
        %717 = vrot.lane.b32.xlu0 %v675, 96
        %v718 = vpop.permute.xlu0 %717
        %719 = vrot.lane.b32.xlu0 %v676, 96
        %v720 = vpop.permute.xlu0 %719
        %721 = vrot.lane.b32.xlu0 %v678, 96
        %v722 = vpop.permute.xlu0 %721
        %723 = vrot.lane.b32.xlu0 %v679, 96
        %v724 = vpop.permute.xlu0 %723
        %725 = vrot.lane.b32.xlu0 %v681, 96
        %v726 = vpop.permute.xlu0 %725
        %727 = vrot.lane.b32.xlu0 %v682, 96
        %v728 = vpop.permute.xlu0 %727
        %729 = vrot.lane.b32.xlu0 %v684, 96
        %v730 = vpop.permute.xlu0 %729
        %731 = vrot.lane.b32.xlu0 %v685, 96
        %v732 = vpop.permute.xlu0 %731
        %733 = vrot.lane.b32.xlu0 %v687, 96
        %v734 = vpop.permute.xlu0 %733
        %735 = vrot.lane.b32.xlu0 %v688, 96
        %v736 = vpop.permute.xlu0 %735
        %737 = vrot.lane.b32.xlu0 %v690, 96
        %v738 = vpop.permute.xlu0 %737
        %739 = vrot.lane.b32.xlu0 %v691, 96
        %v740 = vpop.permute.xlu0 %739
        %vm757 = vcmask 1044224
        %758 = vst.msk [vmem:[#allocation2] sm:$0xf] %vm757, %v710
        %759 = vst.msk [vmem:[#allocation2 + $0xc] sm:$0xf] %vm757, %v712
        %760 = vst.msk [vmem:[#allocation2 + $0x18] sm:$0xf] %vm757, %v714
        %761 = vst.msk [vmem:[#allocation2 + $0x24] sm:$0xf] %vm757, %v716
        %762 = vst.msk [vmem:[#allocation2 + $0x30] sm:$0xf] %vm757, %v718
        %763 = vst.msk [vmem:[#allocation2 + $0x3c] sm:$0xf] %vm757, %v720
        %764 = vst.msk [vmem:[#allocation2 + $0x48] sm:$0xf] %vm757, %v722
        %765 = vst.msk [vmem:[#allocation2 + $0x54] sm:$0xf] %vm757, %v724
        %766 = vst.msk [vmem:[#allocation2 + $0x60] sm:$0xf] %vm757, %v726
        %767 = vst.msk [vmem:[#allocation2 + $0x6c] sm:$0xf] %vm757, %v728
        %768 = vst.msk [vmem:[#allocation2 + $0x78] sm:$0xf] %vm757, %v730
        %769 = vst.msk [vmem:[#allocation2 + $0x84] sm:$0xf] %vm757, %v732
        %770 = vst.msk [vmem:[#allocation2 + $0x90] sm:$0xf] %vm757, %v734
        %771 = vst.msk [vmem:[#allocation2 + $0x9c] sm:$0xf] %vm757, %v736
        %772 = vst.msk [vmem:[#allocation2 + $0xa8] sm:$0xf] %vm757, %v738
        %773 = vst.msk [vmem:[#allocation2 + $0xb4] sm:$0xf] %vm757, %v740
        %v775 = vshrl.u32 %v669, 16
        %v777 = vrot.slane %v775, 4
        %v778 = vshll.u32 %v669, 16
        %v780 = vrot.slane %v778, 5
        %v781 = vor.u32 %v777, %v780
        %v782 = vrot.slane %v781, 4
        %v784 = vshll.u32 %v670, 16
        %v786 = vrot.slane %v784, 5
        %v787 = vsel %vm259, %v782, %v786
        %v788 = vshrl.u32 %v670, 16
        %v790 = vrot.slane %v788, 4
        %v791 = vor.u32 %v790, %v786
        %v792 = vrot.slane %v791, 4
        %v794 = vshll.u32 %v671, 16
        %v796 = vrot.slane %v794, 5
        %v797 = vsel %vm259, %v792, %v796
        %v799 = vshrl.u32 %v672, 16
        %v801 = vrot.slane %v799, 4
        %v802 = vshll.u32 %v672, 16
        %v804 = vrot.slane %v802, 5
        %v805 = vor.u32 %v801, %v804
        %v806 = vrot.slane %v805, 4
        %v808 = vshll.u32 %v673, 16
        %v810 = vrot.slane %v808, 5
        %v811 = vsel %vm259, %v806, %v810
        %v812 = vshrl.u32 %v673, 16
        %v814 = vrot.slane %v812, 4
        %v815 = vor.u32 %v814, %v810
        %v816 = vrot.slane %v815, 4
        %v818 = vshll.u32 %v674, 16
        %v820 = vrot.slane %v818, 5
        %v821 = vsel %vm259, %v816, %v820
        %v823 = vshrl.u32 %v675, 16
        %v825 = vrot.slane %v823, 4
        %v826 = vshll.u32 %v675, 16
        %v828 = vrot.slane %v826, 5
        %v829 = vor.u32 %v825, %v828
        %v830 = vrot.slane %v829, 4
        %v832 = vshll.u32 %v676, 16
        %v834 = vrot.slane %v832, 5
        %v835 = vsel %vm259, %v830, %v834
        %v836 = vshrl.u32 %v676, 16
        %v838 = vrot.slane %v836, 4
        %v839 = vor.u32 %v838, %v834
        %v840 = vrot.slane %v839, 4
        %v842 = vshll.u32 %v677, 16
        %v844 = vrot.slane %v842, 5
        %v845 = vsel %vm259, %v840, %v844
        %v847 = vshrl.u32 %v678, 16
        %v849 = vrot.slane %v847, 4
        %v850 = vshll.u32 %v678, 16
        %v852 = vrot.slane %v850, 5
        %v853 = vor.u32 %v849, %v852
        %v854 = vrot.slane %v853, 4
        %v856 = vshll.u32 %v679, 16
        %v858 = vrot.slane %v856, 5
        %v859 = vsel %vm259, %v854, %v858
        %v860 = vshrl.u32 %v679, 16
        %v862 = vrot.slane %v860, 4
        %v863 = vor.u32 %v862, %v858
        %v864 = vrot.slane %v863, 4
        %v866 = vshll.u32 %v680, 16
        %v868 = vrot.slane %v866, 5
        %v869 = vsel %vm259, %v864, %v868
        %v871 = vshrl.u32 %v681, 16
        %v873 = vrot.slane %v871, 4
        %v874 = vshll.u32 %v681, 16
        %v876 = vrot.slane %v874, 5
        %v877 = vor.u32 %v873, %v876
        %v878 = vrot.slane %v877, 4
        %v880 = vshll.u32 %v682, 16
        %v882 = vrot.slane %v880, 5
        %v883 = vsel %vm259, %v878, %v882
        %v884 = vshrl.u32 %v682, 16
        %v886 = vrot.slane %v884, 4
        %v887 = vor.u32 %v886, %v882
        %v888 = vrot.slane %v887, 4
        %v890 = vshll.u32 %v683, 16
        %v892 = vrot.slane %v890, 5
        %v893 = vsel %vm259, %v888, %v892
        %v895 = vshrl.u32 %v684, 16
        %v897 = vrot.slane %v895, 4
        %v898 = vshll.u32 %v684, 16
        %v900 = vrot.slane %v898, 5
        %v901 = vor.u32 %v897, %v900
        %v902 = vrot.slane %v901, 4
        %v904 = vshll.u32 %v685, 16
        %v906 = vrot.slane %v904, 5
        %v907 = vsel %vm259, %v902, %v906
        %v908 = vshrl.u32 %v685, 16
        %v910 = vrot.slane %v908, 4
        %v911 = vor.u32 %v910, %v906
        %v912 = vrot.slane %v911, 4
        %v914 = vshll.u32 %v686, 16
        %v916 = vrot.slane %v914, 5
        %v917 = vsel %vm259, %v912, %v916
        %v919 = vshrl.u32 %v687, 16
        %v921 = vrot.slane %v919, 4
        %v922 = vshll.u32 %v687, 16
        %v924 = vrot.slane %v922, 5
        %v925 = vor.u32 %v921, %v924
        %v926 = vrot.slane %v925, 4
        %v928 = vshll.u32 %v688, 16
        %v930 = vrot.slane %v928, 5
        %v931 = vsel %vm259, %v926, %v930
        %v932 = vshrl.u32 %v688, 16
        %v934 = vrot.slane %v932, 4
        %v935 = vor.u32 %v934, %v930
        %v936 = vrot.slane %v935, 4
        %v938 = vshll.u32 %v689, 16
        %v940 = vrot.slane %v938, 5
        %v941 = vsel %vm259, %v936, %v940
        %v943 = vshrl.u32 %v690, 16
        %v945 = vrot.slane %v943, 4
        %v946 = vshll.u32 %v690, 16
        %v948 = vrot.slane %v946, 5
        %v949 = vor.u32 %v945, %v948
        %v950 = vrot.slane %v949, 4
        %v952 = vshll.u32 %v691, 16
        %v954 = vrot.slane %v952, 5
        %v955 = vsel %vm259, %v950, %v954
        %v956 = vshrl.u32 %v691, 16
        %v958 = vrot.slane %v956, 4
        %v959 = vor.u32 %v958, %v954
        %v960 = vrot.slane %v959, 4
        %v962 = vshll.u32 %v692, 16
        %v964 = vrot.slane %v962, 5
        %v965 = vsel %vm259, %v960, %v964
        %982 = vst.msk [vmem:[#allocation2 + $0x4] sm:$0xf] %vm240, %v787
        %983 = vst.msk [vmem:[#allocation2 + $0x10] sm:$0xf] %vm240, %v797
        %984 = vst.msk [vmem:[#allocation2 + $0x1c] sm:$0xf] %vm240, %v811
        %985 = vst.msk [vmem:[#allocation2 + $0x28] sm:$0xf] %vm240, %v821
        %986 = vst.msk [vmem:[#allocation2 + $0x34] sm:$0xf] %vm240, %v835
        %987 = vst.msk [vmem:[#allocation2 + $0x40] sm:$0xf] %vm240, %v845
        %988 = vst.msk [vmem:[#allocation2 + $0x4c] sm:$0xf] %vm240, %v859
        %989 = vst.msk [vmem:[#allocation2 + $0x58] sm:$0xf] %vm240, %v869
        %990 = vst.msk [vmem:[#allocation2 + $0x64] sm:$0xf] %vm240, %v883
        %991 = vst.msk [vmem:[#allocation2 + $0x70] sm:$0xf] %vm240, %v893
        %992 = vst.msk [vmem:[#allocation2 + $0x7c] sm:$0xf] %vm240, %v907
        %993 = vst.msk [vmem:[#allocation2 + $0x88] sm:$0xf] %vm240, %v917
        %994 = vst.msk [vmem:[#allocation2 + $0x94] sm:$0xf] %vm240, %v931
        %995 = vst.msk [vmem:[#allocation2 + $0xa0] sm:$0xf] %vm240, %v941
        %996 = vst.msk [vmem:[#allocation2 + $0xac] sm:$0xf] %vm240, %v955
        %997 = vst.msk [vmem:[#allocation2 + $0xb8] sm:$0xf] %vm240, %v965
        %v1006 = vrot.slane %v669, 5
        %v1007 = vrot.slane %v1006, 4
        %v1008 = vrot.slane %v670, 5
        %v1009 = vsel %vm543, %v1007, %v1008
        %v1010 = vrot.slane %v1008, 4
        %v1011 = vrot.slane %v671, 5
        %v1012 = vsel %vm543, %v1010, %v1011
        %v1013 = vrot.slane %v672, 5
        %v1014 = vrot.slane %v1013, 4
        %v1015 = vrot.slane %v673, 5
        %v1016 = vsel %vm543, %v1014, %v1015
        %v1017 = vrot.slane %v1015, 4
        %v1018 = vrot.slane %v674, 5
        %v1019 = vsel %vm543, %v1017, %v1018
        %v1020 = vrot.slane %v675, 5
        %v1021 = vrot.slane %v1020, 4
        %v1022 = vrot.slane %v676, 5
        %v1023 = vsel %vm543, %v1021, %v1022
        %v1024 = vrot.slane %v1022, 4
        %v1025 = vrot.slane %v677, 5
        %v1026 = vsel %vm543, %v1024, %v1025
        %v1027 = vrot.slane %v678, 5
        %v1028 = vrot.slane %v1027, 4
        %v1029 = vrot.slane %v679, 5
        %v1030 = vsel %vm543, %v1028, %v1029
        %v1031 = vrot.slane %v1029, 4
        %v1032 = vrot.slane %v680, 5
        %v1033 = vsel %vm543, %v1031, %v1032
        %v1034 = vrot.slane %v681, 5
        %v1035 = vrot.slane %v1034, 4
        %v1036 = vrot.slane %v682, 5
        %v1037 = vsel %vm543, %v1035, %v1036
        %v1038 = vrot.slane %v1036, 4
        %v1039 = vrot.slane %v683, 5
        %v1040 = vsel %vm543, %v1038, %v1039
        %v1041 = vrot.slane %v684, 5
        %v1042 = vrot.slane %v1041, 4
        %v1043 = vrot.slane %v685, 5
        %v1044 = vsel %vm543, %v1042, %v1043
        %v1045 = vrot.slane %v1043, 4
        %v1046 = vrot.slane %v686, 5
        %v1047 = vsel %vm543, %v1045, %v1046
        %v1048 = vrot.slane %v687, 5
        %v1049 = vrot.slane %v1048, 4
        %v1050 = vrot.slane %v688, 5
        %v1051 = vsel %vm543, %v1049, %v1050
        %v1052 = vrot.slane %v1050, 4
        %v1053 = vrot.slane %v689, 5
        %v1054 = vsel %vm543, %v1052, %v1053
        %v1055 = vrot.slane %v690, 5
        %v1056 = vrot.slane %v1055, 4
        %v1057 = vrot.slane %v691, 5
        %v1058 = vsel %vm543, %v1056, %v1057
        %v1059 = vrot.slane %v1057, 4
        %v1060 = vrot.slane %v692, 5
        %v1061 = vsel %vm543, %v1059, %v1060
        %1062 = vrot.lane.b32.xlu0 %v1009, 32
        %v1063 = vpop.permute.xlu0 %1062
        %1064 = vrot.lane.b32.xlu0 %v1012, 32
        %v1065 = vpop.permute.xlu0 %1064
        %1066 = vrot.lane.b32.xlu0 %v1016, 32
        %v1067 = vpop.permute.xlu0 %1066
        %1068 = vrot.lane.b32.xlu0 %v1019, 32
        %v1069 = vpop.permute.xlu0 %1068
        %1070 = vrot.lane.b32.xlu0 %v1023, 32
        %v1071 = vpop.permute.xlu0 %1070
        %1072 = vrot.lane.b32.xlu0 %v1026, 32
        %v1073 = vpop.permute.xlu0 %1072
        %1074 = vrot.lane.b32.xlu0 %v1030, 32
        %v1075 = vpop.permute.xlu0 %1074
        %1076 = vrot.lane.b32.xlu0 %v1033, 32
        %v1077 = vpop.permute.xlu0 %1076
        %1078 = vrot.lane.b32.xlu0 %v1037, 32
        %v1079 = vpop.permute.xlu0 %1078
        %1080 = vrot.lane.b32.xlu0 %v1040, 32
        %v1081 = vpop.permute.xlu0 %1080
        %1082 = vrot.lane.b32.xlu0 %v1044, 32
        %v1083 = vpop.permute.xlu0 %1082
        %1084 = vrot.lane.b32.xlu0 %v1047, 32
        %v1085 = vpop.permute.xlu0 %1084
        %1086 = vrot.lane.b32.xlu0 %v1051, 32
        %v1087 = vpop.permute.xlu0 %1086
        %1088 = vrot.lane.b32.xlu0 %v1054, 32
        %v1089 = vpop.permute.xlu0 %1088
        %1090 = vrot.lane.b32.xlu0 %v1058, 32
        %v1091 = vpop.permute.xlu0 %1090
        %1092 = vrot.lane.b32.xlu0 %v1061, 32
        %v1093 = vpop.permute.xlu0 %1092
        %1110 = vst.msk [vmem:[#allocation2 + $0x4] sm:$0xf] %vm500, %v1063
        %1111 = vst.msk [vmem:[#allocation2 + $0x10] sm:$0xf] %vm500, %v1065
        %1112 = vst.msk [vmem:[#allocation2 + $0x1c] sm:$0xf] %vm500, %v1067
        %1113 = vst.msk [vmem:[#allocation2 + $0x28] sm:$0xf] %vm500, %v1069
        %1114 = vst.msk [vmem:[#allocation2 + $0x34] sm:$0xf] %vm500, %v1071
        %1115 = vst.msk [vmem:[#allocation2 + $0x40] sm:$0xf] %vm500, %v1073
        %1116 = vst.msk [vmem:[#allocation2 + $0x4c] sm:$0xf] %vm500, %v1075
        %1117 = vst.msk [vmem:[#allocation2 + $0x58] sm:$0xf] %vm500, %v1077
        %1118 = vst.msk [vmem:[#allocation2 + $0x64] sm:$0xf] %vm500, %v1079
        %1119 = vst.msk [vmem:[#allocation2 + $0x70] sm:$0xf] %vm500, %v1081
        %1120 = vst.msk [vmem:[#allocation2 + $0x7c] sm:$0xf] %vm500, %v1083
        %1121 = vst.msk [vmem:[#allocation2 + $0x88] sm:$0xf] %vm500, %v1085
        %1122 = vst.msk [vmem:[#allocation2 + $0x94] sm:$0xf] %vm500, %v1087
        %1123 = vst.msk [vmem:[#allocation2 + $0xa0] sm:$0xf] %vm500, %v1089
        %1124 = vst.msk [vmem:[#allocation2 + $0xac] sm:$0xf] %vm500, %v1091
        %1125 = vst.msk [vmem:[#allocation2 + $0xb8] sm:$0xf] %vm500, %v1093
        %s1126 = sadd.s32 %s212, 2
        %s1127 = smul.u32 %s1126, 3
        %s1128 = smul.addr %s1127, 4
        %s1129 = scalar_lea.vmem %s209, %s1128
        %v1130 = vld [vmem:[%s1129] sm:$0xf]
        %v1131 = vld [vmem:[%s1129 + $0x4] sm:$0xf]
        %v1132 = vld [vmem:[%s1129 + $0x8] sm:$0x1]
        %v1133 = vld [vmem:[%s1129 + $0xc] sm:$0xf]
        %v1134 = vld [vmem:[%s1129 + $0x10] sm:$0xf]
        %v1135 = vld [vmem:[%s1129 + $0x14] sm:$0x1]
        %v1136 = vld [vmem:[%s1129 + $0x18] sm:$0xf]
        %v1137 = vld [vmem:[%s1129 + $0x1c] sm:$0xf]
        %v1138 = vld [vmem:[%s1129 + $0x20] sm:$0x1]
        %v1139 = vld [vmem:[%s1129 + $0x24] sm:$0xf]
        %v1140 = vld [vmem:[%s1129 + $0x28] sm:$0xf]
        %v1141 = vld [vmem:[%s1129 + $0x2c] sm:$0x1]
        %v1142 = vld [vmem:[%s1129 + $0x30] sm:$0xf]
        %v1143 = vld [vmem:[%s1129 + $0x34] sm:$0xf]
        %v1144 = vld [vmem:[%s1129 + $0x38] sm:$0x1]
        %v1145 = vld [vmem:[%s1129 + $0x3c] sm:$0xf]
        %v1146 = vld [vmem:[%s1129 + $0x40] sm:$0xf]
        %v1147 = vld [vmem:[%s1129 + $0x44] sm:$0x1]
        %v1148 = vld [vmem:[%s1129 + $0x48] sm:$0xf]
        %v1149 = vld [vmem:[%s1129 + $0x4c] sm:$0xf]
        %v1150 = vld [vmem:[%s1129 + $0x50] sm:$0x1]
        %v1151 = vld [vmem:[%s1129 + $0x54] sm:$0xf]
        %v1152 = vld [vmem:[%s1129 + $0x58] sm:$0xf]
        %v1153 = vld [vmem:[%s1129 + $0x5c] sm:$0x1]
        %1170 = vrot.lane.b32.xlu0 %v1130, 64
        %v1171 = vpop.permute.xlu0 %1170
        %1172 = vrot.lane.b32.xlu0 %v1131, 64
        %v1173 = vpop.permute.xlu0 %1172
        %1174 = vrot.lane.b32.xlu0 %v1133, 64
        %v1175 = vpop.permute.xlu0 %1174
        %1176 = vrot.lane.b32.xlu0 %v1134, 64
        %v1177 = vpop.permute.xlu0 %1176
        %1178 = vrot.lane.b32.xlu0 %v1136, 64
        %v1179 = vpop.permute.xlu0 %1178
        %1180 = vrot.lane.b32.xlu0 %v1137, 64
        %v1181 = vpop.permute.xlu0 %1180
        %1182 = vrot.lane.b32.xlu0 %v1139, 64
        %v1183 = vpop.permute.xlu0 %1182
        %1184 = vrot.lane.b32.xlu0 %v1140, 64
        %v1185 = vpop.permute.xlu0 %1184
        %1186 = vrot.lane.b32.xlu0 %v1142, 64
        %v1187 = vpop.permute.xlu0 %1186
        %1188 = vrot.lane.b32.xlu0 %v1143, 64
        %v1189 = vpop.permute.xlu0 %1188
        %1190 = vrot.lane.b32.xlu0 %v1145, 64
        %v1191 = vpop.permute.xlu0 %1190
        %1192 = vrot.lane.b32.xlu0 %v1146, 64
        %v1193 = vpop.permute.xlu0 %1192
        %1194 = vrot.lane.b32.xlu0 %v1148, 64
        %v1195 = vpop.permute.xlu0 %1194
        %1196 = vrot.lane.b32.xlu0 %v1149, 64
        %v1197 = vpop.permute.xlu0 %1196
        %1198 = vrot.lane.b32.xlu0 %v1151, 64
        %v1199 = vpop.permute.xlu0 %1198
        %1200 = vrot.lane.b32.xlu0 %v1152, 64
        %v1201 = vpop.permute.xlu0 %1200
        %1218 = vst.msk [vmem:[#allocation2 + $0x4] sm:$0xf] %vm648, %v1171
        %1219 = vst.msk [vmem:[#allocation2 + $0x10] sm:$0xf] %vm648, %v1173
        %1220 = vst.msk [vmem:[#allocation2 + $0x1c] sm:$0xf] %vm648, %v1175
        %1221 = vst.msk [vmem:[#allocation2 + $0x28] sm:$0xf] %vm648, %v1177
        %1222 = vst.msk [vmem:[#allocation2 + $0x34] sm:$0xf] %vm648, %v1179
        %1223 = vst.msk [vmem:[#allocation2 + $0x40] sm:$0xf] %vm648, %v1181
        %1224 = vst.msk [vmem:[#allocation2 + $0x4c] sm:$0xf] %vm648, %v1183
        %1225 = vst.msk [vmem:[#allocation2 + $0x58] sm:$0xf] %vm648, %v1185
        %1226 = vst.msk [vmem:[#allocation2 + $0x64] sm:$0xf] %vm648, %v1187
        %1227 = vst.msk [vmem:[#allocation2 + $0x70] sm:$0xf] %vm648, %v1189
        %1228 = vst.msk [vmem:[#allocation2 + $0x7c] sm:$0xf] %vm648, %v1191
        %1229 = vst.msk [vmem:[#allocation2 + $0x88] sm:$0xf] %vm648, %v1193
        %1230 = vst.msk [vmem:[#allocation2 + $0x94] sm:$0xf] %vm648, %v1195
        %1231 = vst.msk [vmem:[#allocation2 + $0xa0] sm:$0xf] %vm648, %v1197
        %1232 = vst.msk [vmem:[#allocation2 + $0xac] sm:$0xf] %vm648, %v1199
        %1233 = vst.msk [vmem:[#allocation2 + $0xb8] sm:$0xf] %vm648, %v1201
        %v1235 = vshrl.u32 %v1130, 16
        %v1237 = vrot.slane %v1235, 4
        %v1238 = vshll.u32 %v1130, 16
        %v1240 = vrot.slane %v1238, 5
        %v1241 = vor.u32 %v1237, %v1240
        %v1242 = vrot.slane %v1241, 4
        %v1244 = vshll.u32 %v1131, 16
        %v1246 = vrot.slane %v1244, 5
        %v1247 = vsel %vm259, %v1242, %v1246
        %v1248 = vshrl.u32 %v1131, 16
        %v1250 = vrot.slane %v1248, 4
        %v1251 = vor.u32 %v1250, %v1246
        %v1252 = vrot.slane %v1251, 4
        %v1254 = vshll.u32 %v1132, 16
        %v1256 = vrot.slane %v1254, 5
        %v1257 = vsel %vm259, %v1252, %v1256
        %v1259 = vshrl.u32 %v1133, 16
        %v1261 = vrot.slane %v1259, 4
        %v1262 = vshll.u32 %v1133, 16
        %v1264 = vrot.slane %v1262, 5
        %v1265 = vor.u32 %v1261, %v1264
        %v1266 = vrot.slane %v1265, 4
        %v1268 = vshll.u32 %v1134, 16
        %v1270 = vrot.slane %v1268, 5
        %v1271 = vsel %vm259, %v1266, %v1270
        %v1272 = vshrl.u32 %v1134, 16
        %v1274 = vrot.slane %v1272, 4
        %v1275 = vor.u32 %v1274, %v1270
        %v1276 = vrot.slane %v1275, 4
        %v1278 = vshll.u32 %v1135, 16
        %v1280 = vrot.slane %v1278, 5
        %v1281 = vsel %vm259, %v1276, %v1280
        %v1283 = vshrl.u32 %v1136, 16
        %v1285 = vrot.slane %v1283, 4
        %v1286 = vshll.u32 %v1136, 16
        %v1288 = vrot.slane %v1286, 5
        %v1289 = vor.u32 %v1285, %v1288
        %v1290 = vrot.slane %v1289, 4
        %v1292 = vshll.u32 %v1137, 16
        %v1294 = vrot.slane %v1292, 5
        %v1295 = vsel %vm259, %v1290, %v1294
        %v1296 = vshrl.u32 %v1137, 16
        %v1298 = vrot.slane %v1296, 4
        %v1299 = vor.u32 %v1298, %v1294
        %v1300 = vrot.slane %v1299, 4
        %v1302 = vshll.u32 %v1138, 16
        %v1304 = vrot.slane %v1302, 5
        %v1305 = vsel %vm259, %v1300, %v1304
        %v1307 = vshrl.u32 %v1139, 16
        %v1309 = vrot.slane %v1307, 4
        %v1310 = vshll.u32 %v1139, 16
        %v1312 = vrot.slane %v1310, 5
        %v1313 = vor.u32 %v1309, %v1312
        %v1314 = vrot.slane %v1313, 4
        %v1316 = vshll.u32 %v1140, 16
        %v1318 = vrot.slane %v1316, 5
        %v1319 = vsel %vm259, %v1314, %v1318
        %v1320 = vshrl.u32 %v1140, 16
        %v1322 = vrot.slane %v1320, 4
        %v1323 = vor.u32 %v1322, %v1318
        %v1324 = vrot.slane %v1323, 4
        %v1326 = vshll.u32 %v1141, 16
        %v1328 = vrot.slane %v1326, 5
        %v1329 = vsel %vm259, %v1324, %v1328
        %v1331 = vshrl.u32 %v1142, 16
        %v1333 = vrot.slane %v1331, 4
        %v1334 = vshll.u32 %v1142, 16
        %v1336 = vrot.slane %v1334, 5
        %v1337 = vor.u32 %v1333, %v1336
        %v1338 = vrot.slane %v1337, 4
        %v1340 = vshll.u32 %v1143, 16
        %v1342 = vrot.slane %v1340, 5
        %v1343 = vsel %vm259, %v1338, %v1342
        %v1344 = vshrl.u32 %v1143, 16
        %v1346 = vrot.slane %v1344, 4
        %v1347 = vor.u32 %v1346, %v1342
        %v1348 = vrot.slane %v1347, 4
        %v1350 = vshll.u32 %v1144, 16
        %v1352 = vrot.slane %v1350, 5
        %v1353 = vsel %vm259, %v1348, %v1352
        %v1355 = vshrl.u32 %v1145, 16
        %v1357 = vrot.slane %v1355, 4
        %v1358 = vshll.u32 %v1145, 16
        %v1360 = vrot.slane %v1358, 5
        %v1361 = vor.u32 %v1357, %v1360
        %v1362 = vrot.slane %v1361, 4
        %v1364 = vshll.u32 %v1146, 16
        %v1366 = vrot.slane %v1364, 5
        %v1367 = vsel %vm259, %v1362, %v1366
        %v1368 = vshrl.u32 %v1146, 16
        %v1370 = vrot.slane %v1368, 4
        %v1371 = vor.u32 %v1370, %v1366
        %v1372 = vrot.slane %v1371, 4
        %v1374 = vshll.u32 %v1147, 16
        %v1376 = vrot.slane %v1374, 5
        %v1377 = vsel %vm259, %v1372, %v1376
        %v1379 = vshrl.u32 %v1148, 16
        %v1381 = vrot.slane %v1379, 4
        %v1382 = vshll.u32 %v1148, 16
        %v1384 = vrot.slane %v1382, 5
        %v1385 = vor.u32 %v1381, %v1384
        %v1386 = vrot.slane %v1385, 4
        %v1388 = vshll.u32 %v1149, 16
        %v1390 = vrot.slane %v1388, 5
        %v1391 = vsel %vm259, %v1386, %v1390
        %v1392 = vshrl.u32 %v1149, 16
        %v1394 = vrot.slane %v1392, 4
        %v1395 = vor.u32 %v1394, %v1390
        %v1396 = vrot.slane %v1395, 4
        %v1398 = vshll.u32 %v1150, 16
        %v1400 = vrot.slane %v1398, 5
        %v1401 = vsel %vm259, %v1396, %v1400
        %v1403 = vshrl.u32 %v1151, 16
        %v1405 = vrot.slane %v1403, 4
        %v1406 = vshll.u32 %v1151, 16
        %v1408 = vrot.slane %v1406, 5
        %v1409 = vor.u32 %v1405, %v1408
        %v1410 = vrot.slane %v1409, 4
        %v1412 = vshll.u32 %v1152, 16
        %v1414 = vrot.slane %v1412, 5
        %v1415 = vsel %vm259, %v1410, %v1414
        %v1416 = vshrl.u32 %v1152, 16
        %v1418 = vrot.slane %v1416, 4
        %v1419 = vor.u32 %v1418, %v1414
        %v1420 = vrot.slane %v1419, 4
        %v1422 = vshll.u32 %v1153, 16
        %v1424 = vrot.slane %v1422, 5
        %v1425 = vsel %vm259, %v1420, %v1424
        %1426 = vrot.lane.b32.xlu0 %v1247, 96
        %v1427 = vpop.permute.xlu0 %1426
        %1428 = vrot.lane.b32.xlu0 %v1257, 96
        %v1429 = vpop.permute.xlu0 %1428
        %1430 = vrot.lane.b32.xlu0 %v1271, 96
        %v1431 = vpop.permute.xlu0 %1430
        %1432 = vrot.lane.b32.xlu0 %v1281, 96
        %v1433 = vpop.permute.xlu0 %1432
        %1434 = vrot.lane.b32.xlu0 %v1295, 96
        %v1435 = vpop.permute.xlu0 %1434
        %1436 = vrot.lane.b32.xlu0 %v1305, 96
        %v1437 = vpop.permute.xlu0 %1436
        %1438 = vrot.lane.b32.xlu0 %v1319, 96
        %v1439 = vpop.permute.xlu0 %1438
        %1440 = vrot.lane.b32.xlu0 %v1329, 96
        %v1441 = vpop.permute.xlu0 %1440
        %1442 = vrot.lane.b32.xlu0 %v1343, 96
        %v1443 = vpop.permute.xlu0 %1442
        %1444 = vrot.lane.b32.xlu0 %v1353, 96
        %v1445 = vpop.permute.xlu0 %1444
        %1446 = vrot.lane.b32.xlu0 %v1367, 96
        %v1447 = vpop.permute.xlu0 %1446
        %1448 = vrot.lane.b32.xlu0 %v1377, 96
        %v1449 = vpop.permute.xlu0 %1448
        %1450 = vrot.lane.b32.xlu0 %v1391, 96
        %v1451 = vpop.permute.xlu0 %1450
        %1452 = vrot.lane.b32.xlu0 %v1401, 96
        %v1453 = vpop.permute.xlu0 %1452
        %1454 = vrot.lane.b32.xlu0 %v1415, 96
        %v1455 = vpop.permute.xlu0 %1454
        %1456 = vrot.lane.b32.xlu0 %v1425, 96
        %v1457 = vpop.permute.xlu0 %1456
        %1474 = vst.msk [vmem:[#allocation2 + $0x4] sm:$0xf] %vm757, %v1427
        %1475 = vst.msk [vmem:[#allocation2 + $0x10] sm:$0xf] %vm757, %v1429
        %1476 = vst.msk [vmem:[#allocation2 + $0x1c] sm:$0xf] %vm757, %v1431
        %1477 = vst.msk [vmem:[#allocation2 + $0x28] sm:$0xf] %vm757, %v1433
        %1478 = vst.msk [vmem:[#allocation2 + $0x34] sm:$0xf] %vm757, %v1435
        %1479 = vst.msk [vmem:[#allocation2 + $0x40] sm:$0xf] %vm757, %v1437
        %1480 = vst.msk [vmem:[#allocation2 + $0x4c] sm:$0xf] %vm757, %v1439
        %1481 = vst.msk [vmem:[#allocation2 + $0x58] sm:$0xf] %vm757, %v1441
        %1482 = vst.msk [vmem:[#allocation2 + $0x64] sm:$0xf] %vm757, %v1443
        %1483 = vst.msk [vmem:[#allocation2 + $0x70] sm:$0xf] %vm757, %v1445
        %1484 = vst.msk [vmem:[#allocation2 + $0x7c] sm:$0xf] %vm757, %v1447
        %1485 = vst.msk [vmem:[#allocation2 + $0x88] sm:$0xf] %vm757, %v1449
        %1486 = vst.msk [vmem:[#allocation2 + $0x94] sm:$0xf] %vm757, %v1451
        %1487 = vst.msk [vmem:[#allocation2 + $0xa0] sm:$0xf] %vm757, %v1453
        %1488 = vst.msk [vmem:[#allocation2 + $0xac] sm:$0xf] %vm757, %v1455
        %1489 = vst.msk [vmem:[#allocation2 + $0xb8] sm:$0xf] %vm757, %v1457
        %v1498 = vrot.slane %v1130, 5
        %v1499 = vrot.slane %v1498, 4
        %v1500 = vrot.slane %v1131, 5
        %v1501 = vsel %vm543, %v1499, %v1500
        %v1502 = vrot.slane %v1500, 4
        %v1503 = vrot.slane %v1132, 5
        %v1504 = vsel %vm543, %v1502, %v1503
        %v1505 = vrot.slane %v1133, 5
        %v1506 = vrot.slane %v1505, 4
        %v1507 = vrot.slane %v1134, 5
        %v1508 = vsel %vm543, %v1506, %v1507
        %v1509 = vrot.slane %v1507, 4
        %v1510 = vrot.slane %v1135, 5
        %v1511 = vsel %vm543, %v1509, %v1510
        %v1512 = vrot.slane %v1136, 5
        %v1513 = vrot.slane %v1512, 4
        %v1514 = vrot.slane %v1137, 5
        %v1515 = vsel %vm543, %v1513, %v1514
        %v1516 = vrot.slane %v1514, 4
        %v1517 = vrot.slane %v1138, 5
        %v1518 = vsel %vm543, %v1516, %v1517
        %v1519 = vrot.slane %v1139, 5
        %v1520 = vrot.slane %v1519, 4
        %v1521 = vrot.slane %v1140, 5
        %v1522 = vsel %vm543, %v1520, %v1521
        %v1523 = vrot.slane %v1521, 4
        %v1524 = vrot.slane %v1141, 5
        %v1525 = vsel %vm543, %v1523, %v1524
        %v1526 = vrot.slane %v1142, 5
        %v1527 = vrot.slane %v1526, 4
        %v1528 = vrot.slane %v1143, 5
        %v1529 = vsel %vm543, %v1527, %v1528
        %v1530 = vrot.slane %v1528, 4
        %v1531 = vrot.slane %v1144, 5
        %v1532 = vsel %vm543, %v1530, %v1531
        %v1533 = vrot.slane %v1145, 5
        %v1534 = vrot.slane %v1533, 4
        %v1535 = vrot.slane %v1146, 5
        %v1536 = vsel %vm543, %v1534, %v1535
        %v1537 = vrot.slane %v1535, 4
        %v1538 = vrot.slane %v1147, 5
        %v1539 = vsel %vm543, %v1537, %v1538
        %v1540 = vrot.slane %v1148, 5
        %v1541 = vrot.slane %v1540, 4
        %v1542 = vrot.slane %v1149, 5
        %v1543 = vsel %vm543, %v1541, %v1542
        %v1544 = vrot.slane %v1542, 4
        %v1545 = vrot.slane %v1150, 5
        %v1546 = vsel %vm543, %v1544, %v1545
        %v1547 = vrot.slane %v1151, 5
        %v1548 = vrot.slane %v1547, 4
        %v1549 = vrot.slane %v1152, 5
        %v1550 = vsel %vm543, %v1548, %v1549
        %v1551 = vrot.slane %v1549, 4
        %v1552 = vrot.slane %v1153, 5
        %v1553 = vsel %vm543, %v1551, %v1552
        %1570 = vst.msk [vmem:[#allocation2 + $0x8] sm:$0xf] %vm240, %v1501
        %1571 = vst.msk [vmem:[#allocation2 + $0x14] sm:$0xf] %vm240, %v1504
        %1572 = vst.msk [vmem:[#allocation2 + $0x20] sm:$0xf] %vm240, %v1508
        %1573 = vst.msk [vmem:[#allocation2 + $0x2c] sm:$0xf] %vm240, %v1511
        %1574 = vst.msk [vmem:[#allocation2 + $0x38] sm:$0xf] %vm240, %v1515
        %1575 = vst.msk [vmem:[#allocation2 + $0x44] sm:$0xf] %vm240, %v1518
        %1576 = vst.msk [vmem:[#allocation2 + $0x50] sm:$0xf] %vm240, %v1522
        %1577 = vst.msk [vmem:[#allocation2 + $0x5c] sm:$0xf] %vm240, %v1525
        %1578 = vst.msk [vmem:[#allocation2 + $0x68] sm:$0xf] %vm240, %v1529
        %1579 = vst.msk [vmem:[#allocation2 + $0x74] sm:$0xf] %vm240, %v1532
        %1580 = vst.msk [vmem:[#allocation2 + $0x80] sm:$0xf] %vm240, %v1536
        %1581 = vst.msk [vmem:[#allocation2 + $0x8c] sm:$0xf] %vm240, %v1539
        %1582 = vst.msk [vmem:[#allocation2 + $0x98] sm:$0xf] %vm240, %v1543
        %1583 = vst.msk [vmem:[#allocation2 + $0xa4] sm:$0xf] %vm240, %v1546
        %1584 = vst.msk [vmem:[#allocation2 + $0xb0] sm:$0xf] %vm240, %v1550
        %1585 = vst.msk [vmem:[#allocation2 + $0xbc] sm:$0xf] %vm240, %v1553
        %v1586 = vld [vmem:[#allocation2] sm:$0xff]
        %v1587 = vld [vmem:[#allocation2 + $0x8] sm:$0xf]
        %v1588 = vld [vmem:[#allocation2 + $0xc] sm:$0xff]
        %v1589 = vld [vmem:[#allocation2 + $0x14] sm:$0xf]
        %v1590 = vld [vmem:[#allocation2 + $0x18] sm:$0xff]
        %v1591 = vld [vmem:[#allocation2 + $0x20] sm:$0xf]
        %v1592 = vld [vmem:[#allocation2 + $0x24] sm:$0xff]
        %v1593 = vld [vmem:[#allocation2 + $0x2c] sm:$0xf]
        %v1594 = vld [vmem:[#allocation2 + $0x30] sm:$0xff]
        %v1595 = vld [vmem:[#allocation2 + $0x38] sm:$0xf]
        %v1596 = vld [vmem:[#allocation2 + $0x3c] sm:$0xff]
        %v1597 = vld [vmem:[#allocation2 + $0x44] sm:$0xf]
        %v1598 = vld [vmem:[#allocation2 + $0x48] sm:$0xff]
        %v1599 = vld [vmem:[#allocation2 + $0x50] sm:$0xf]
        %v1600 = vld [vmem:[#allocation2 + $0x54] sm:$0xff]
        %v1601 = vld [vmem:[#allocation2 + $0x5c] sm:$0xf]
        %v1602 = vld [vmem:[#allocation2 + $0x60] sm:$0xff]
        %v1603 = vld [vmem:[#allocation2 + $0x68] sm:$0xf]
        %v1604 = vld [vmem:[#allocation2 + $0x6c] sm:$0xff]
        %v1605 = vld [vmem:[#allocation2 + $0x74] sm:$0xf]
        %v1606 = vld [vmem:[#allocation2 + $0x78] sm:$0xff]
        %v1607 = vld [vmem:[#allocation2 + $0x80] sm:$0xf]
        %v1608 = vld [vmem:[#allocation2 + $0x84] sm:$0xff]
        %v1609 = vld [vmem:[#allocation2 + $0x8c] sm:$0xf]
        %v1610 = vld [vmem:[#allocation2 + $0x90] sm:$0xff]
        %v1611 = vld [vmem:[#allocation2 + $0x98] sm:$0xf]
        %v1612 = vld [vmem:[#allocation2 + $0x9c] sm:$0xff]
        %v1613 = vld [vmem:[#allocation2 + $0xa4] sm:$0xf]
        %v1614 = vld [vmem:[#allocation2 + $0xa8] sm:$0xff]
        %v1615 = vld [vmem:[#allocation2 + $0xb0] sm:$0xf]
        %v1616 = vld [vmem:[#allocation2 + $0xb4] sm:$0xff]
        %v1617 = vld [vmem:[#allocation2 + $0xbc] sm:$0xf]
        %v1618 = vld [vmem:[%s1] sm:$0xf]
        %v1619 = vld [vmem:[%s1 + $0x4] sm:$0xf]
        %v1620 = vld [vmem:[%s1 + $0x8] sm:$0xf]
        %v1621 = vld [vmem:[%s1 + $0xc] sm:$0xf]
        %v1622 = vld [vmem:[%s1 + $0x10] sm:$0xf]
        %v1623 = vld [vmem:[%s1 + $0x14] sm:$0xf]
        %v1624 = vld [vmem:[%s1 + $0x18] sm:$0xf]
        %v1625 = vld [vmem:[%s1 + $0x1c] sm:$0xf]
        %v1626 = vld [vmem:[%s1 + $0x20] sm:$0xf]
        %v1627 = vld [vmem:[%s1 + $0x24] sm:$0xf]
        %v1628 = vld [vmem:[%s1 + $0x28] sm:$0xf]
        %v1629 = vld [vmem:[%s1 + $0x2c] sm:$0xf]
        %v1630 = vld [vmem:[%s1 + $0x30] sm:$0xf]
        %v1631 = vld [vmem:[%s1 + $0x34] sm:$0xf]
        %v1632 = vld [vmem:[%s1 + $0x38] sm:$0xf]
        %v1633 = vld [vmem:[%s1 + $0x3c] sm:$0xf]
        %v1634 = vld [vmem:[%s1 + $0x40] sm:$0xf]
        %v1635 = vld [vmem:[%s1 + $0x44] sm:$0xf]
        %v1636 = vld [vmem:[%s1 + $0x48] sm:$0xf]
        %v1637 = vld [vmem:[%s1 + $0x4c] sm:$0xf]
        %v1638 = vld [vmem:[%s1 + $0x50] sm:$0xf]
        %v1639 = vld [vmem:[%s1 + $0x54] sm:$0xf]
        %v1640 = vld [vmem:[%s1 + $0x58] sm:$0xf]
        %v1641 = vld [vmem:[%s1 + $0x5c] sm:$0xf]
        %v1642 = vld [vmem:[%s1 + $0x60] sm:$0xf]
        %v1643 = vld [vmem:[%s1 + $0x64] sm:$0xf]
        %v1644 = vld [vmem:[%s1 + $0x68] sm:$0xf]
        %v1645 = vld [vmem:[%s1 + $0x6c] sm:$0xf]
        %v1646 = vld [vmem:[%s1 + $0x70] sm:$0xf]
        %v1647 = vld [vmem:[%s1 + $0x74] sm:$0xf]
        %v1648 = vld [vmem:[%s1 + $0x78] sm:$0xf]
        %v1649 = vld [vmem:[%s1 + $0x7c] sm:$0xf]
        %v1650 = vld [vmem:[%s1 + $0x80] sm:$0xf]
        %v1651 = vld [vmem:[%s1 + $0x84] sm:$0xf]
        %v1652 = vld [vmem:[%s1 + $0x88] sm:$0xf]
        %v1653 = vld [vmem:[%s1 + $0x8c] sm:$0xf]
        %v1654 = vld [vmem:[%s2] sm:$0x1]
        %v1656 = vperm.slane %v1654, 0
        %v1690 = vunpack.c.l.b16 %v1586
        %v1691 = vunpack.c.h.b16 %v1586
        %v1692 = vunpack.c.l.b16 %v1587
        %v1693 = vunpack.c.l.b16 %v1588
        %v1694 = vunpack.c.h.b16 %v1588
        %v1695 = vunpack.c.l.b16 %v1589
        %v1696 = vunpack.c.l.b16 %v1590
        %v1697 = vunpack.c.h.b16 %v1590
        %v1698 = vunpack.c.l.b16 %v1591
        %v1699 = vunpack.c.l.b16 %v1592
        %v1700 = vunpack.c.h.b16 %v1592
        %v1701 = vunpack.c.l.b16 %v1593
        %v1702 = vunpack.c.l.b16 %v1594
        %v1703 = vunpack.c.h.b16 %v1594
        %v1704 = vunpack.c.l.b16 %v1595
        %v1705 = vunpack.c.l.b16 %v1596
        %v1706 = vunpack.c.h.b16 %v1596
        %v1707 = vunpack.c.l.b16 %v1597
        %v1708 = vunpack.c.l.b16 %v1598
        %v1709 = vunpack.c.h.b16 %v1598
        %v1710 = vunpack.c.l.b16 %v1599
        %v1711 = vunpack.c.l.b16 %v1600
        %v1712 = vunpack.c.h.b16 %v1600
        %v1713 = vunpack.c.l.b16 %v1601
        %v1714 = vunpack.c.l.b16 %v1602
        %v1715 = vunpack.c.h.b16 %v1602
        %v1716 = vunpack.c.l.b16 %v1603
        %v1717 = vunpack.c.l.b16 %v1604
        %v1718 = vunpack.c.h.b16 %v1604
        %v1719 = vunpack.c.l.b16 %v1605
        %v1720 = vunpack.c.l.b16 %v1606
        %v1721 = vunpack.c.h.b16 %v1606
        %v1722 = vunpack.c.l.b16 %v1607
        %v1723 = vunpack.c.l.b16 %v1608
        %v1724 = vunpack.c.h.b16 %v1608
        %v1725 = vunpack.c.l.b16 %v1609
        %v1726 = vunpack.c.l.b16 %v1610
        %v1727 = vunpack.c.h.b16 %v1610
        %v1728 = vunpack.c.l.b16 %v1611
        %v1729 = vunpack.c.l.b16 %v1612
        %v1730 = vunpack.c.h.b16 %v1612
        %v1731 = vunpack.c.l.b16 %v1613
        %v1732 = vunpack.c.l.b16 %v1614
        %v1733 = vunpack.c.h.b16 %v1614
        %v1734 = vunpack.c.l.b16 %v1615
        %v1735 = vunpack.c.l.b16 %v1616
        %v1736 = vunpack.c.h.b16 %v1616
        %v1737 = vunpack.c.l.b16 %v1617
        %v1738 = vpack.c.b16 %v1693, %v1690
        %v1739 = vpack.c.b16 %v1694, %v1691
        %v1740 = vpack.c.b16 %v1695, %v1692
        %v1741 = vpack.c.b16 %v1699, %v1696
        %v1742 = vpack.c.b16 %v1700, %v1697
        %v1743 = vpack.c.b16 %v1701, %v1698
        %v1744 = vpack.c.b16 %v1705, %v1702
        %v1745 = vpack.c.b16 %v1706, %v1703
        %v1746 = vpack.c.b16 %v1707, %v1704
        %v1747 = vpack.c.b16 %v1711, %v1708
        %v1748 = vpack.c.b16 %v1712, %v1709
        %v1749 = vpack.c.b16 %v1713, %v1710
        %v1750 = vpack.c.b16 %v1717, %v1714
        %v1751 = vpack.c.b16 %v1718, %v1715
        %v1752 = vpack.c.b16 %v1719, %v1716
        %v1753 = vpack.c.b16 %v1723, %v1720
        %v1754 = vpack.c.b16 %v1724, %v1721
        %v1755 = vpack.c.b16 %v1725, %v1722
        %v1756 = vpack.c.b16 %v1729, %v1726
        %v1757 = vpack.c.b16 %v1730, %v1727
        %v1758 = vpack.c.b16 %v1731, %v1728
        %v1759 = vpack.c.b16 %v1735, %v1732
        %v1760 = vpack.c.b16 %v1736, %v1733
        %v1761 = vpack.c.b16 %v1737, %v1734
        %v1814 = vunpack.c.l.b16 %v1618
        %v1815 = vunpack.c.l.b16 %v1619
        %v1816 = vunpack.c.l.b16 %v1620
        %v1817 = vunpack.c.l.b16 %v1621
        %v1818 = vunpack.c.l.b16 %v1622
        %v1819 = vunpack.c.l.b16 %v1623
        %v1820 = vunpack.c.l.b16 %v1624
        %v1821 = vunpack.c.l.b16 %v1625
        %v1822 = vunpack.c.l.b16 %v1626
        %v1823 = vunpack.c.l.b16 %v1627
        %v1824 = vunpack.c.l.b16 %v1628
        %v1825 = vunpack.c.l.b16 %v1629
        %v1826 = vunpack.c.l.b16 %v1630
        %v1827 = vunpack.c.l.b16 %v1631
        %v1828 = vunpack.c.l.b16 %v1632
        %v1829 = vunpack.c.l.b16 %v1633
        %v1830 = vunpack.c.l.b16 %v1634
        %v1831 = vunpack.c.l.b16 %v1635
        %v1832 = vunpack.c.l.b16 %v1636
        %v1833 = vunpack.c.l.b16 %v1637
        %v1834 = vunpack.c.l.b16 %v1638
        %v1835 = vunpack.c.l.b16 %v1639
        %v1836 = vunpack.c.l.b16 %v1640
        %v1837 = vunpack.c.l.b16 %v1641
        %v1838 = vunpack.c.l.b16 %v1642
        %v1839 = vunpack.c.l.b16 %v1643
        %v1840 = vunpack.c.l.b16 %v1644
        %v1841 = vunpack.c.l.b16 %v1645
        %v1842 = vunpack.c.l.b16 %v1646
        %v1843 = vunpack.c.l.b16 %v1647
        %v1844 = vunpack.c.l.b16 %v1648
        %v1845 = vunpack.c.l.b16 %v1649
        %v1846 = vunpack.c.l.b16 %v1650
        %v1847 = vunpack.c.l.b16 %v1651
        %v1848 = vunpack.c.l.b16 %v1652
        %v1849 = vunpack.c.l.b16 %v1653
        %v1850 = vpack.c.b16 %v1815, %v1814
        %v1851 = vpack.c.b16 %v1817, %v1816
        %v1852 = vpack.c.b16 %v1819, %v1818
        %v1853 = vpack.c.b16 %v1821, %v1820
        %v1854 = vpack.c.b16 %v1823, %v1822
        %v1855 = vpack.c.b16 %v1825, %v1824
        %v1856 = vpack.c.b16 %v1827, %v1826
        %v1857 = vpack.c.b16 %v1829, %v1828
        %v1858 = vpack.c.b16 %v1831, %v1830
        %v1859 = vpack.c.b16 %v1833, %v1832
        %v1860 = vpack.c.b16 %v1835, %v1834
        %v1861 = vpack.c.b16 %v1837, %v1836
        %v1862 = vpack.c.b16 %v1839, %v1838
        %v1863 = vpack.c.b16 %v1841, %v1840
        %v1864 = vpack.c.b16 %v1843, %v1842
        %v1865 = vpack.c.b16 %v1845, %v1844
        %v1866 = vpack.c.b16 %v1847, %v1846
        %v1867 = vpack.c.b16 %v1849, %v1848
        %vm1886 = vcmask 261120
        %v1888 = vsel %vm1886, %v1740, 0
        %v1891 = vsel %vm1886, %v1743, 0
        %v1894 = vsel %vm1886, %v1746, 0
        %v1897 = vsel %vm1886, %v1749, 0
        %v1900 = vsel %vm1886, %v1752, 0
        %v1903 = vsel %vm1886, %v1755, 0
        %v1906 = vsel %vm1886, %v1758, 0
        %v1909 = vsel %vm1886, %v1761, 0
        %1911 = vmatpush.bf16.msra.mxu0 %v1857
        %1912 = vmatpush.bf16.msra.mxu0 %v1856
        %1913 = vmatpush.bf16.msra.mxu0 %v1855
        %1914 = vmatpush.bf16.msra.mxu0 %v1854
        %1915 = vmatpush.bf16.msra.mxu0 %v1853
        %1916 = vmatpush.bf16.msra.mxu0 %v1852
        %1917 = vmatpush.bf16.msra.mxu0 %v1851
        %1918 = vmatpush.bf16.msra.mxu0 %v1850
        %1919 = vmatmul.bf16.gmra.mxu0 %v1738
        %v1920 = vpop.f32.mrf.mxu0
        %v1921 = vadd.f32 %v1656, %v1920
        %v1922 = vpop.f32.mrf.mxu0
        %v1923 = vadd.f32 %v1656, %v1922
        %1924 = vmatmul.bf16.gmra.mxu0 %v1741
        %v1925 = vpop.f32.mrf.mxu0
        %v1926 = vadd.f32 %v1656, %v1925
        %v1927 = vpop.f32.mrf.mxu0
        %v1928 = vadd.f32 %v1656, %v1927
        %1929 = vmatmul.bf16.gmra.mxu0 %v1744
        %v1930 = vpop.f32.mrf.mxu0
        %v1931 = vadd.f32 %v1656, %v1930
        %v1932 = vpop.f32.mrf.mxu0
        %v1933 = vadd.f32 %v1656, %v1932
        %1934 = vmatmul.bf16.gmra.mxu0 %v1747
        %v1935 = vpop.f32.mrf.mxu0
        %v1936 = vadd.f32 %v1656, %v1935
        %v1937 = vpop.f32.mrf.mxu0
        %v1938 = vadd.f32 %v1656, %v1937
        %1939 = vmatmul.bf16.gmra.mxu0 %v1750
        %v1940 = vpop.f32.mrf.mxu0
        %v1941 = vadd.f32 %v1656, %v1940
        %v1942 = vpop.f32.mrf.mxu0
        %v1943 = vadd.f32 %v1656, %v1942
        %1944 = vmatmul.bf16.gmra.mxu0 %v1753
        %v1945 = vpop.f32.mrf.mxu0
        %v1946 = vadd.f32 %v1656, %v1945
        %v1947 = vpop.f32.mrf.mxu0
        %v1948 = vadd.f32 %v1656, %v1947
        %1949 = vmatmul.bf16.gmra.mxu0 %v1756
        %v1950 = vpop.f32.mrf.mxu0
        %v1951 = vadd.f32 %v1656, %v1950
        %v1952 = vpop.f32.mrf.mxu0
        %v1953 = vadd.f32 %v1656, %v1952
        %1954 = vmatmul.bf16.gmra.mxu0 %v1759
        %v1955 = vpop.f32.mrf.mxu0
        %v1956 = vadd.f32 %v1656, %v1955
        %v1957 = vpop.f32.mrf.mxu0
        %v1958 = vadd.f32 %v1656, %v1957
        %1959 = vdwg.mxu0
        %1960 = vmatpush.bf16.msra.mxu0 %v1865
        %1961 = vmatpush.bf16.msra.mxu0 %v1864
        %1962 = vmatpush.bf16.msra.mxu0 %v1863
        %1963 = vmatpush.bf16.msra.mxu0 %v1862
        %1964 = vmatpush.bf16.msra.mxu0 %v1861
        %1965 = vmatpush.bf16.msra.mxu0 %v1860
        %1966 = vmatpush.bf16.msra.mxu0 %v1859
        %1967 = vmatpush.bf16.msra.mxu0 %v1858
        %1968 = vmatmul.bf16.gmra.mxu0 %v1739
        %v1969 = vpop.f32.mrf.mxu0
        %v1970 = vadd.f32 %v1921, %v1969
        %v1971 = vpop.f32.mrf.mxu0
        %v1972 = vadd.f32 %v1923, %v1971
        %1973 = vmatmul.bf16.gmra.mxu0 %v1742
        %v1974 = vpop.f32.mrf.mxu0
        %v1975 = vadd.f32 %v1926, %v1974
        %v1976 = vpop.f32.mrf.mxu0
        %v1977 = vadd.f32 %v1928, %v1976
        %1978 = vmatmul.bf16.gmra.mxu0 %v1745
        %v1979 = vpop.f32.mrf.mxu0
        %v1980 = vadd.f32 %v1931, %v1979
        %v1981 = vpop.f32.mrf.mxu0
        %v1982 = vadd.f32 %v1933, %v1981
        %1983 = vmatmul.bf16.gmra.mxu0 %v1748
        %v1984 = vpop.f32.mrf.mxu0
        %v1985 = vadd.f32 %v1936, %v1984
        %v1986 = vpop.f32.mrf.mxu0
        %v1987 = vadd.f32 %v1938, %v1986
        %1988 = vmatmul.bf16.gmra.mxu0 %v1751
        %v1989 = vpop.f32.mrf.mxu0
        %v1990 = vadd.f32 %v1941, %v1989
        %v1991 = vpop.f32.mrf.mxu0
        %v1992 = vadd.f32 %v1943, %v1991
        %1993 = vmatmul.bf16.gmra.mxu0 %v1754
        %v1994 = vpop.f32.mrf.mxu0
        %v1995 = vadd.f32 %v1946, %v1994
        %v1996 = vpop.f32.mrf.mxu0
        %v1997 = vadd.f32 %v1948, %v1996
        %1998 = vmatmul.bf16.gmra.mxu0 %v1757
        %v1999 = vpop.f32.mrf.mxu0
        %v2000 = vadd.f32 %v1951, %v1999
        %v2001 = vpop.f32.mrf.mxu0
        %v2002 = vadd.f32 %v1953, %v2001
        %2003 = vmatmul.bf16.gmra.mxu0 %v1760
        %v2004 = vpop.f32.mrf.mxu0
        %v2005 = vadd.f32 %v1956, %v2004
        %v2006 = vpop.f32.mrf.mxu0
        %v2007 = vadd.f32 %v1958, %v2006
        %2008 = vdwg.mxu0
        %2009 = vmatpush.bf16.msra.mxu0 0
        %2010 = vmatpush.bf16.msra.mxu0 0
        %2011 = vmatpush.bf16.msra.mxu0 0
        %2012 = vmatpush.bf16.msra.mxu0 0
        %2013 = vmatpush.bf16.msra.mxu0 0
        %2014 = vmatpush.bf16.msra.mxu0 0
        %2015 = vmatpush.bf16.msra.mxu0 %v1867
        %2016 = vmatpush.bf16.msra.mxu0 %v1866
        %2017 = vmatmul.bf16.gmra.mxu0 %v1888
        %v2018 = vpop.f32.mrf.mxu0
        %v2019 = vadd.f32 %v1970, %v2018
        %v2020 = vpop.f32.mrf.mxu0
        %v2021 = vadd.f32 %v1972, %v2020
        %2022 = vmatmul.bf16.gmra.mxu0 %v1891
        %v2023 = vpop.f32.mrf.mxu0
        %v2024 = vadd.f32 %v1975, %v2023
        %v2025 = vpop.f32.mrf.mxu0
        %v2026 = vadd.f32 %v1977, %v2025
        %2027 = vmatmul.bf16.gmra.mxu0 %v1894
        %v2028 = vpop.f32.mrf.mxu0
        %v2029 = vadd.f32 %v1980, %v2028
        %v2030 = vpop.f32.mrf.mxu0
        %v2031 = vadd.f32 %v1982, %v2030
        %2032 = vmatmul.bf16.gmra.mxu0 %v1897
        %v2033 = vpop.f32.mrf.mxu0
        %v2034 = vadd.f32 %v1985, %v2033
        %v2035 = vpop.f32.mrf.mxu0
        %v2036 = vadd.f32 %v1987, %v2035
        %2037 = vmatmul.bf16.gmra.mxu0 %v1900
        %v2038 = vpop.f32.mrf.mxu0
        %v2039 = vadd.f32 %v1990, %v2038
        %v2040 = vpop.f32.mrf.mxu0
        %v2041 = vadd.f32 %v1992, %v2040
        %2042 = vmatmul.bf16.gmra.mxu0 %v1903
        %v2043 = vpop.f32.mrf.mxu0
        %v2044 = vadd.f32 %v1995, %v2043
        %v2045 = vpop.f32.mrf.mxu0
        %v2046 = vadd.f32 %v1997, %v2045
        %2047 = vmatmul.bf16.gmra.mxu0 %v1906
        %v2048 = vpop.f32.mrf.mxu0
        %v2049 = vadd.f32 %v2000, %v2048
        %v2050 = vpop.f32.mrf.mxu0
        %v2051 = vadd.f32 %v2002, %v2050
        %2052 = vmatmul.bf16.gmra.mxu0 %v1909
        %v2053 = vpop.f32.mrf.mxu0
        %v2054 = vadd.f32 %v2005, %v2053
        %v2055 = vpop.f32.mrf.mxu0
        %v2056 = vadd.f32 %v2007, %v2055
        %2057 = vdwg.mxu0
        %v2058 = vmax.f32 %v2019, 0.0
        %v2059 = vmax.f32 %v2021, 0.0
        %v2060 = vmax.f32 %v2024, 0.0
        %v2061 = vmax.f32 %v2026, 0.0
        %v2062 = vmax.f32 %v2029, 0.0
        %v2063 = vmax.f32 %v2031, 0.0
        %v2064 = vmax.f32 %v2034, 0.0
        %v2065 = vmax.f32 %v2036, 0.0
        %v2066 = vmax.f32 %v2039, 0.0
        %v2067 = vmax.f32 %v2041, 0.0
        %v2068 = vmax.f32 %v2044, 0.0
        %v2069 = vmax.f32 %v2046, 0.0
        %v2070 = vmax.f32 %v2049, 0.0
        %v2071 = vmax.f32 %v2051, 0.0
        %v2072 = vmax.f32 %v2054, 0.0
        %v2073 = vmax.f32 %v2056, 0.0
        %v2074 = vpack.c.bf16 %v2059, %v2058
        %v2075 = vpack.c.bf16 %v2061, %v2060
        %v2076 = vpack.c.bf16 %v2063, %v2062
        %v2077 = vpack.c.bf16 %v2065, %v2064
        %v2078 = vpack.c.bf16 %v2067, %v2066
        %v2079 = vpack.c.bf16 %v2069, %v2068
        %v2080 = vpack.c.bf16 %v2071, %v2070
        %v2081 = vpack.c.bf16 %v2073, %v2072
        %v2082 = vld [vmem:[%s3] sm:$0xf]
        %v2083 = vld [vmem:[%s3 + $0x4] sm:$0xf]
        %v2084 = vld [vmem:[%s3 + $0x8] sm:$0xf]
        %v2085 = vld [vmem:[%s3 + $0xc] sm:$0xf]
        %v2090 = vunpack.c.l.b16 %v2082
        %v2091 = vunpack.c.l.b16 %v2083
        %v2092 = vunpack.c.l.b16 %v2084
        %v2093 = vunpack.c.l.b16 %v2085
        %v2094 = vpack.c.b16 %v2091, %v2090
        %v2095 = vpack.c.b16 %v2093, %v2092
        %v2099 = vsel %vm1886, %v2074, 0
        %v2102 = vsel %vm1886, %v2075, 0
        %v2105 = vsel %vm1886, %v2076, 0
        %v2108 = vsel %vm1886, %v2077, 0
        %v2111 = vsel %vm1886, %v2078, 0
        %v2114 = vsel %vm1886, %v2079, 0
        %v2117 = vsel %vm1886, %v2080, 0
        %v2120 = vsel %vm1886, %v2081, 0
        %2122 = vmatpush.bf16.msra.mxu0 0
        %2123 = vmatpush.bf16.msra.mxu0 0
        %2124 = vmatpush.bf16.msra.mxu0 0
        %2125 = vmatpush.bf16.msra.mxu0 0
        %2126 = vmatpush.bf16.msra.mxu0 0
        %2127 = vmatpush.bf16.msra.mxu0 0
        %2128 = vmatpush.bf16.msra.mxu0 %v2095
        %2129 = vmatpush.bf16.msra.mxu0 %v2094
        %2130 = vmatmul.bf16.gmra.mxu0 %v2099
        %v2131 = vpop.f32.mrf.mxu0
        %v2132 = vadd.f32 0.0, %v2131
        %v2133 = vpop.f32.mrf.mxu0
        %v2134 = vadd.f32 0.0, %v2133
        %2135 = vmatmul.bf16.gmra.mxu0 %v2102
        %v2136 = vpop.f32.mrf.mxu0
        %v2137 = vadd.f32 0.0, %v2136
        %v2138 = vpop.f32.mrf.mxu0
        %v2139 = vadd.f32 0.0, %v2138
        %2140 = vmatmul.bf16.gmra.mxu0 %v2105
        %v2141 = vpop.f32.mrf.mxu0
        %v2142 = vadd.f32 0.0, %v2141
        %v2143 = vpop.f32.mrf.mxu0
        %v2144 = vadd.f32 0.0, %v2143
        %2145 = vmatmul.bf16.gmra.mxu0 %v2108
        %v2146 = vpop.f32.mrf.mxu0
        %v2147 = vadd.f32 0.0, %v2146
        %v2148 = vpop.f32.mrf.mxu0
        %v2149 = vadd.f32 0.0, %v2148
        %2150 = vmatmul.bf16.gmra.mxu0 %v2111
        %v2151 = vpop.f32.mrf.mxu0
        %v2152 = vadd.f32 0.0, %v2151
        %v2153 = vpop.f32.mrf.mxu0
        %v2154 = vadd.f32 0.0, %v2153
        %2155 = vmatmul.bf16.gmra.mxu0 %v2114
        %v2156 = vpop.f32.mrf.mxu0
        %v2157 = vadd.f32 0.0, %v2156
        %v2158 = vpop.f32.mrf.mxu0
        %v2159 = vadd.f32 0.0, %v2158
        %2160 = vmatmul.bf16.gmra.mxu0 %v2117
        %v2161 = vpop.f32.mrf.mxu0
        %v2162 = vadd.f32 0.0, %v2161
        %v2163 = vpop.f32.mrf.mxu0
        %v2164 = vadd.f32 0.0, %v2163
        %2165 = vmatmul.bf16.gmra.mxu0 %v2120
        %v2166 = vpop.f32.mrf.mxu0
        %v2167 = vadd.f32 0.0, %v2166
        %v2168 = vpop.f32.mrf.mxu0
        %v2169 = vadd.f32 0.0, %v2168
        %2170 = vdwg.mxu0
        %2171 = vst.msk [vmem:[%s204] sm:$0xff] %vm1886, %v2132
        %2172 = vst.msk [vmem:[%s204 + $0x8] sm:$0xff] %vm1886, %v2134
        %2173 = vst.msk [vmem:[%s204 + $0x10] sm:$0xff] %vm1886, %v2137
        %2174 = vst.msk [vmem:[%s204 + $0x18] sm:$0xff] %vm1886, %v2139
        %2175 = vst.msk [vmem:[%s204 + $0x20] sm:$0xff] %vm1886, %v2142
        %2176 = vst.msk [vmem:[%s204 + $0x28] sm:$0xff] %vm1886, %v2144
        %2177 = vst.msk [vmem:[%s204 + $0x30] sm:$0xff] %vm1886, %v2147
        %2178 = vst.msk [vmem:[%s204 + $0x38] sm:$0xff] %vm1886, %v2149
        %2179 = vst.msk [vmem:[%s204 + $0x40] sm:$0xff] %vm1886, %v2152
        %2180 = vst.msk [vmem:[%s204 + $0x48] sm:$0xff] %vm1886, %v2154
        %2181 = vst.msk [vmem:[%s204 + $0x50] sm:$0xff] %vm1886, %v2157
        %2182 = vst.msk [vmem:[%s204 + $0x58] sm:$0xff] %vm1886, %v2159
        %2183 = vst.msk [vmem:[%s204 + $0x60] sm:$0xff] %vm1886, %v2162
        %2184 = vst.msk [vmem:[%s204 + $0x68] sm:$0xff] %vm1886, %v2164
        %2185 = vst.msk [vmem:[%s204 + $0x70] sm:$0xff] %vm1886, %v2167
        %2186 = vst.msk [vmem:[%s204 + $0x78] sm:$0xff] %vm1886, %v2169
        %s2187 = sand.u32 %s129, 1
        %s2188 = scalar_lea.sflag [#allocation4], %s2187
        %s2189 = sand.u32 %s129, 1
        %s2190 = smul.addr %s2189, 128
        %s2191 = scalar_lea.vmem [#allocation3], %s2190
        // Predicated region
        $region37: #{conv_attention.1} parent=35 // pred_check
          %p2192 = pneg %p139
        $region38: #{conv_attention.1} parent=35 // pred_check_branch
          %2194 = sbr.rel (%p2192) target = $region40
        $region39: #{conv_attention.1} parent=35 // pred_region
          %s2195 = smul.u32 16, %s23
          %2197 = vsyncadd %s2188, 0
          %s2198 = smul.addr %s22, 32
          %s2199 = sadd.s32 %s2195, %s2198
          %s2200 = smul.addr %s2199, 8
          %s2201 = scalar_lea.hbm %s4, %s2200
          %s2202 = sshll.u32 %s2191, 4
          %s2203 = int_to_ptr.vmem [resolvable:$true] %s2202
          %s2204 = sshll.u32 %s2201, 4
          %s2205 = int_to_ptr.hbm [resolvable:$true] %s2204
          %2210 = dma.vmem_to_hbm [thread:$0]  %s2203, 2048, %s2205, %s2188, 128, 128, 8
        $region40: #{conv_attention.1} parent=35 // pred_fallthru
          _
      $region36: #{conv_attention.1} parent=5 // pred_fallthru
        _
      %p2211 = scmp.le.s32.totalorder 2, %s13
      // Predicated region
      $region41: #{conv_attention.1} parent=5 // pred_check
        %p2212 = pneg %p2211
      $region42: #{conv_attention.1} parent=5 // pred_check_branch
        %2214 = sbr.rel (%p2212) target = $region44
      $region43: #{conv_attention.1} parent=5 // pred_region
        %s2215 = ssub.s32 %s13, 2
        // Predicated region
        $region45: #{conv_attention.1} parent=43 // pred_check
          %p2216 = pneg %p145
        $region46: #{conv_attention.1} parent=43 // pred_check_branch
          %2218 = sbr.rel (%p2216) target = $region48
        $region47: #{conv_attention.1} parent=43 // pred_region
          %s2219 = sand.u32 %s130, 1
          %s2220 = scalar_lea.sflag [#allocation4], %s2219
          %s2221 = sand.u32 %s130, 1
          %s2222 = smul.addr %s2221, 128
          %s2223 = scalar_lea.vmem [#allocation3], %s2222
          %2225 = dma.done %s2220, 2048
        $region48: #{conv_attention.1} parent=43 // pred_fallthru
          _
      $region44: #{conv_attention.1} parent=5 // pred_fallthru
        _
    $region6: #{conv_attention.1} parent=1 // loop_footer
      %s17 = sadd.s32 1, %s13
    $region7: #{conv_attention.1} parent=1 // loop_footer_branch
      %12 = sbr.rel target = $region3
    $region8: #{conv_attention.1} parent=1 // loop_exit
      _
    %2226 = vsyncpa [#allocation4], 1
    %s2227 = scalar_lea.sflag [#allocation4], 1
    %2228 = vsyncpa %s2227, 1

</llo_original>
